<compile_context>
chip_gen: v7x
topology: tpu7x:2x2x1
jax: 0.10.0
libtpu: 0.0.40
codegen_flags: <defaults>
</compile_context>

<pallas_src>
import functools

import jax
import jax.numpy as jnp
import numpy as np
from jax import lax
from jax.experimental import pallas as pl
from jax.experimental.pallas import tpu as pltpu

D_BERT = 768                 # utt-encoder hidden size
D_EMB = 4                    # label embedding size (nn.Embedding(class_num, 4))
D_LSTM = D_BERT + D_EMB      # 772 = decoder LSTM input/hidden size
D_PAD = 896                  # 772 padded to 7*128 lanes
C_PAD = 128                  # class_num padded to one lane tile


def _round_up(x, m):
    return (x + m - 1) // m * m


# ---------------------------------------------------------------------------
# Per-chip knobs
# ---------------------------------------------------------------------------
def _vmem_cap_bytes():
    """~80% of this chip's per-core VMEM (headroom for compiler-internal scratch).
    v5e/v6e: ~102 MiB, v7x: ~51 MiB.  Conservative fallback if the query fails."""
    try:
        return int(pltpu.get_tpu_info().vmem_capacity_bytes * 0.8)
    except Exception:
        return 48 << 20


_SB_PROBED = False
_SB_MODE = None


def _single_buffer_mode():
    """pl.Buffered(1) for fully-resident blocks of a grid=(1,) kernel (nothing to
    pipeline, so default double buffering only doubles VMEM).  Probed once with a
    tiny kernel so the script still runs on jax builds without pipeline_mode or
    buffer_count=1 support."""
    global _SB_PROBED, _SB_MODE
    if _SB_PROBED:
        return _SB_MODE
    try:
        sb = pl.Buffered(1)

        def _probe(x_ref, o_ref):
            o_ref[...] = x_ref[...] + 1.0

        out = pl.pallas_call(
            _probe,
            out_shape=jax.ShapeDtypeStruct((8, 128), jnp.float32),
            grid=(1,),
            in_specs=[pl.BlockSpec((8, 128), lambda i: (0, 0), pipeline_mode=sb)],
            out_specs=pl.BlockSpec((8, 128), lambda i: (0, 0), pipeline_mode=sb),
        )(jnp.zeros((8, 128), jnp.float32))
        out = np.asarray(jax.block_until_ready(out))
        if not np.allclose(out, 1.0):
            raise ValueError("Buffered(1) probe produced wrong values")
        _SB_MODE = sb
    except Exception:
        _SB_MODE = None
    _SB_PROBED = True
    return _SB_MODE


def _resident_spec(shape, index_map):
    """BlockSpec for a block whose index_map is grid-invariant (fully resident)."""
    sb = _single_buffer_mode()
    if sb is not None:
        return pl.BlockSpec(shape, index_map, pipeline_mode=sb)
    return pl.BlockSpec(shape, index_map)


# ---------------------------------------------------------------------------
# Pallas kernels
# ---------------------------------------------------------------------------
def _affine_kernel(x_ref, w_ref, b_ref, o_ref, *, act):
    """o = act(x @ w + b) for one M-tile; bf16 operands, f32 accumulation."""
    y = jnp.dot(x_ref[...], w_ref[...], preferred_element_type=jnp.float32) + b_ref[...]
    if act == "tanh":
        y = jnp.tanh(y)
    o_ref[...] = y.astype(o_ref.dtype)


def affine(x, w, b, act=None, out_dtype=jnp.float32, tm_max=512):
    """y = act(x @ w + b), tiled over rows with a 'parallel' (megacore-shardable)
    grid axis.  Weights/bias are grid-invariant -> single-buffered when supported."""
    M, K = x.shape
    K2, N = w.shape
    assert K == K2
    tm = min(tm_max, _round_up(M, 8))
    Mp = _round_up(M, tm)
    if Mp != M:
        x = jnp.pad(x, ((0, Mp - M), (0, 0)))

    nbuf_w = 1 if _single_buffer_mode() is not None else 2
    vmem = (2 * (tm * K * x.dtype.itemsize
                 + tm * N * jnp.dtype(out_dtype).itemsize)
            + nbuf_w * (K * N * w.dtype.itemsize + 8 * N * 4)
            + (4 << 20))
    vmem = int(min(max(vmem, 32 << 20), _vmem_cap_bytes()))

    out = pl.pallas_call(
        functools.partial(_affine_kernel, act=act),
        out_shape=jax.ShapeDtypeStruct((Mp, N), out_dtype),
        grid=(Mp // tm,),
        in_specs=[
            pl.BlockSpec((tm, K), lambda i: (i, 0)),
            _resident_spec((K, N), lambda i: (0, 0)),
            _resident_spec((1, N), lambda i: (0, 0)),
        ],
        out_specs=pl.BlockSpec((tm, N), lambda i: (i, 0)),
        compiler_params=pltpu.CompilerParams(
            dimension_semantics=("parallel",),
            vmem_limit_bytes=vmem,
        ),
    )(x, w, b.reshape(1, N).astype(jnp.float32))
    return out[:M]


def _lstm_cls_kernel(x_ref, wih_ref, bg_ref, whh_ref, wcls_ref, bcls_ref,
                     o_ref, xg_scr, hall_scr, *, dp, T):
    """Fused decoder: (1) input-side gate preactivations xg = x @ W_ih + b for all
    T steps in one MXU matmul into VMEM scratch, (2) serial LSTM recurrence
    (PyTorch gate order i,f,g,o; h/c carried in vregs, only the recurrent h@W_hh
    bf16 matmul runs per step), (3) hoisted classifier matmul on bf16 h_all."""
    xg_scr[...] = jnp.dot(x_ref[...], wih_ref[...],
                          preferred_element_type=jnp.float32) + bg_ref[...]

    def step(t, carry):
        h, c = carry
        gates = xg_scr[pl.ds(t, 1), :] + jnp.dot(
            h.astype(whh_ref.dtype), whh_ref[...],
            preferred_element_type=jnp.float32)
        i = jax.nn.sigmoid(gates[:, 0 * dp:1 * dp])
        f = jax.nn.sigmoid(gates[:, 1 * dp:2 * dp])
        g = jnp.tanh(gates[:, 2 * dp:3 * dp])
        o = jax.nn.sigmoid(gates[:, 3 * dp:4 * dp])
        c_new = f * c + i * g
        h_new = o * jnp.tanh(c_new)
        hall_scr[pl.ds(t, 1), :] = h_new.astype(hall_scr.dtype)
        return (h_new, c_new)

    h0 = jnp.zeros((1, dp), jnp.float32)
    c0 = jnp.zeros((1, dp), jnp.float32)
    lax.fori_loop(0, T, step, (h0, c0), unroll=4)

    # One MXU-friendly [T, dp] x [dp, cp] matmul + bulk lane-dense store.
    o_ref[...] = jnp.dot(hall_scr[...], wcls_ref[...],
                         preferred_element_type=jnp.float32) + bcls_ref[...]


def lstm_classifier(x_p, wih_p, b_gates, whh_p, wcls_p, bcls_p):
    T, dp = x_p.shape
    gp = wih_p.shape[1]          # 4 * dp
    cp = wcls_p.shape[1]

    nbuf = 1 if _single_buffer_mode() is not None else 2
    vmem = (nbuf * (T * dp * x_p.dtype.itemsize          # x (bf16)
                    + dp * gp * wih_p.dtype.itemsize     # W_ih (bf16)
                    + 8 * gp * 4                         # b_gates (f32, padded rows)
                    + dp * gp * whh_p.dtype.itemsize     # W_hh (bf16)
                    + dp * cp * wcls_p.dtype.itemsize    # W_cls (bf16)
                    + 8 * cp * 4                         # b_cls
                    + T * cp * 4)                        # out (f32)
            + T * gp * 4                                 # xg scratch (f32)
            + T * dp * 2                                 # h_all scratch (bf16)
            + (4 << 20))
    vmem = int(min(max(vmem, 32 << 20), _vmem_cap_bytes()))

    return pl.pallas_call(
        functools.partial(_lstm_cls_kernel, dp=dp, T=T),
        out_shape=jax.ShapeDtypeStruct((T, cp), jnp.float32),
        grid=(1,),
        in_specs=[
            _resident_spec((T, dp), lambda i: (0, 0)),
            _resident_spec((dp, gp), lambda i: (0, 0)),
            _resident_spec((1, gp), lambda i: (0, 0)),
            _resident_spec((dp, gp), lambda i: (0, 0)),
            _resident_spec((dp, cp), lambda i: (0, 0)),
            _resident_spec((1, cp), lambda i: (0, 0)),
        ],
        out_specs=_resident_spec((T, cp), lambda i: (0, 0)),
        scratch_shapes=[
            pltpu.VMEM((T, gp), jnp.float32),     # xg (gate preactivations)
            pltpu.VMEM((T, dp), jnp.bfloat16),    # h_all (classifier operand)
        ],
        compiler_params=pltpu.CompilerParams(
            dimension_semantics=("arbitrary",),
            vmem_limit_bytes=vmem,
        ),
    )(x_p, wih_p, b_gates.reshape(1, gp), whh_p, wcls_p, bcls_p.reshape(1, cp))


# ---------------------------------------------------------------------------
# Parameters (deterministic synthetic init, shapes from the module's __init__)
# ---------------------------------------------------------------------------
def init_params(key, vocab, class_num):
    ks = jax.random.split(key, 10)

    def n(k, shape, scale):
        return jax.random.normal(k, shape, jnp.float32) * scale

    s = 1.0 / np.sqrt(D_LSTM)
    return {
        "tok_emb": n(ks[0], (vocab, D_BERT), 0.5),
        "w_enc": n(ks[1], (D_BERT, D_BERT), 1.0 / np.sqrt(D_BERT)),
        "b_enc": n(ks[2], (D_BERT,), 0.02),
        "cls_emb": n(ks[3], (class_num, D_EMB), 0.5),         # nn.Embedding(class_num, 4)
        "w_ih": n(ks[4], (4 * D_LSTM, D_LSTM), s),            # LSTM weight_ih_l0
        "w_hh": n(ks[5], (4 * D_LSTM, D_LSTM), s),            # LSTM weight_hh_l0
        "b_ih": n(ks[6], (4 * D_LSTM,), s),
        "b_hh": n(ks[7], (4 * D_LSTM,), s),
        "w_cls": n(ks[8], (class_num, D_LSTM), s),            # nn.Linear(772, class_num)
        "b_cls": n(ks[9], (class_num,), s),
    }


def pack_params(p):
    """Transpose + zero-pad PyTorch-layout weights into lane-aligned kernel layout.
    Gate blocks are placed at offsets k*D_PAD so gate slices are 128-aligned.
    Matmul operands are stored in bfloat16 (f32 accumulation in the kernels)."""
    def pack_gates(w):  # [4*D_LSTM, D_LSTM] -> [D_PAD, 4*D_PAD]
        out = np.zeros((D_PAD, 4 * D_PAD), np.float32)
        w = np.asarray(w)
        for k in range(4):
            out[:D_LSTM, k * D_PAD:k * D_PAD + D_LSTM] = w[k * D_LSTM:(k + 1) * D_LSTM, :].T
        return jnp.asarray(out, dtype=jnp.bfloat16)

    wih_p = pack_gates(p["w_ih"])
    whh_p = pack_gates(p["w_hh"])

    b = np.zeros((4 * D_PAD,), np.float32)
    bsum = np.asarray(p["b_ih"] + p["b_hh"])
    for k in range(4):
        b[k * D_PAD:k * D_PAD + D_LSTM] = bsum[k * D_LSTM:(k + 1) * D_LSTM]
    # Padding invariant: pad lanes of the gate bias must stay exactly zero so the
    # padded gate channels produce c=h=0 forever.
    pad_mask = np.ones((4 * D_PAD,), dtype=bool)
    for k in range(4):
        pad_mask[k * D_PAD:k * D_PAD + D_LSTM] = False
    assert not np.any(b[pad_mask]), "gate-bias pad lanes must be exactly zero"

    c = p["w_cls"].shape[0]
    wcls_p = np.zeros((D_PAD, C_PAD), np.float32)
    wcls_p[:D_LSTM, :c] = np.asarray(p["w_cls"]).T
    bcls_p = np.zeros((C_PAD,), np.float32)
    bcls_p[:c] = np.asarray(p["b_cls"])

    return {
        "w_enc": jnp.asarray(np.asarray(p["w_enc"]), dtype=jnp.bfloat16),
        "b_enc": p["b_enc"],
        "w_ih": wih_p,
        "b_gates": jnp.asarray(b),
        "w_hh": whh_p,
        "w_cls": jnp.asarray(wcls_p, dtype=jnp.bfloat16),
        "b_cls": jnp.asarray(bcls_p),
    }


# ---------------------------------------------------------------------------
# Forward pass (mirrors AutoRegressiveModel.forward)
# ---------------------------------------------------------------------------
def forward(params, packed, ids, mask, y, class_num):
    N, L = ids.shape

    # H1 = utt_encoder(ids, mask).last_hidden_state ; pooling = H1[:, 0]
    # Synthetic per-token encoder => only token 0 needs to be computed.
    emb0 = params["tok_emb"][ids[:, 0]] * mask[:, 0:1]                   # [N, 768]
    h1 = affine(emb0.astype(jnp.bfloat16), packed["w_enc"], packed["b_enc"],
                act="tanh", out_dtype=jnp.bfloat16)                      # [N, 768] bf16

    # y_inp = roll(y, 1); y_embed = embedding(y_inp); y_embed[0] = 0
    y_inp = jnp.roll(y, 1, axis=0)
    y_embed = params["cls_emb"][y_inp].at[0, :].set(0.0)                 # [N, 4]

    # H2 = conv_encoder(H1) -- ContextModel('baseline') == identity.
    # x = concat(H2, y_embed), lane-padded to D_PAD, bf16 (MXU operand).
    x_p = jnp.zeros((N, D_PAD), jnp.bfloat16)
    x_p = x_p.at[:, :D_BERT].set(h1)
    x_p = x_p.at[:, D_BERT:D_LSTM].set(y_embed.astype(jnp.bfloat16))

    # H3 = decoder(x)[0]; logits = classifier(H3) -- one fused Pallas kernel
    # (gate preactivations + LSTM recurrence + classifier, no xg HBM round trip).
    logits_p = lstm_classifier(x_p, packed["w_ih"], packed["b_gates"],
                               packed["w_hh"], packed["w_cls"], packed["b_cls"])
    return logits_p[:, :class_num]                                       # [N, class_num]


# Pure-JAX reference (same synthetic encoder, unpadded f32 PyTorch-layout math).
def reference_forward(params, ids, mask, y, class_num):
    N, L = ids.shape
    emb = params["tok_emb"][ids] * mask[..., None]
    h_all = jnp.tanh(emb.reshape(N * L, D_BERT) @ params["w_enc"] + params["b_enc"])
    h1 = h_all.reshape(N, L, D_BERT)[:, 0, :]
    y_embed = params["cls_emb"][jnp.roll(y, 1, axis=0)].at[0, :].set(0.0)
    x = jnp.concatenate([h1, y_embed], axis=-1)

    D = D_LSTM
    wih, whh = params["w_ih"], params["w_hh"]
    bias = params["b_ih"] + params["b_hh"]

    def step(carry, x_t):
        h, c = carry
        gates = x_t @ wih.T + h @ whh.T + bias
        i = jax.nn.sigmoid(gates[0:D])
        f = jax.nn.sigmoid(gates[D:2 * D])
        g = jnp.tanh(gates[2 * D:3 * D])
        o = jax.nn.sigmoid(gates[3 * D:4 * D])
        c = f * c + i * g
        h = o * jnp.tanh(c)
        return (h, c), h

    (_, _), hs = lax.scan(step, (jnp.zeros(D), jnp.zeros(D)), x)
    return hs @ params["w_cls"].T + params["b_cls"]


if __name__ == "__main__":
    N_UTT, L_TOK, VOCAB, CLASS_NUM = 8, 16, 50, 5

    key = jax.random.PRNGKey(0)
    k_ids, k_y, k_param = jax.random.split(key, 3)
    ids = jax.random.randint(k_ids, (N_UTT, L_TOK), 0, VOCAB, dtype=jnp.int32)
    mask = jnp.ones((N_UTT, L_TOK), jnp.float32).at[:, L_TOK - 2:].set(0.0)
    y = jax.random.randint(k_y, (N_UTT,), 0, CLASS_NUM, dtype=jnp.int32)

    params = init_params(k_param, VOCAB, CLASS_NUM)
    packed = pack_params(params)

    logits = forward(params, packed, ids, mask, y, CLASS_NUM)
    logits = jax.block_until_ready(logits)

    assert logits.shape == (N_UTT, CLASS_NUM)
    assert np.all(np.isfinite(np.asarray(logits)))

    ref = reference_forward(params, ids, mask, y, CLASS_NUM)
    err = float(jnp.max(jnp.abs(logits - ref)))
    assert err < 5e-2, f"max abs err vs reference: {err}"

    print("KERNEL_OK")
</pallas_src>

<mosaic_0001>
module attributes {stable_mosaic.version = 11 : i64} {
  func.func @_probe(%arg0: i32, %arg1: memref<8x128xf32, #tpu.memory_space<vmem>>, %arg2: memref<8x128xf32, #tpu.memory_space<vmem>>) attributes {dimension_semantics = [#tpu.dimension_semantics<arbitrary>], iteration_bounds = array<i64: 1>, scalar_prefetch = 0 : i64, scratch_operands = 0 : i64, tpu.core_type = #tpu.core_type<tc>, window_params = [{pipeline_mode = #tpu.pipeline_mode<synchronous>, transform_indices = @transform_0, window_bounds = array<i64: 8, 128>}, {pipeline_mode = #tpu.pipeline_mode<synchronous>, transform_indices = @transform_1, window_bounds = array<i64: 8, 128>}]} {
    %c0 = arith.constant 0 : index
    %c0_0 = arith.constant 0 : index
    %0 = vector.load %arg1[%c0, %c0_0] : memref<8x128xf32, #tpu.memory_space<vmem>>, vector<8x128xf32>
    %cst = arith.constant 1.000000e+00 : f32
    %1 = vector.broadcast %cst : f32 to vector<8x128xf32>
    %2 = arith.addf %0, %1 : vector<8x128xf32>
    %c0_1 = arith.constant 0 : index
    %c0_2 = arith.constant 0 : index
    %3 = vector.load %arg2[%c0_1, %c0_2] : memref<8x128xf32, #tpu.memory_space<vmem>>, vector<8x128xf32>
    tpu.vector_store %arg2[%c0_1, %c0_2], %2 {strides = array<i32>} : memref<8x128xf32, #tpu.memory_space<vmem>>, vector<8x128xf32>,
    return
  }
  func.func @transform_0(%arg0: i32) -> (i32, i32) {
    %c0_i32 = arith.constant 0 : i32
    %c0_i32_0 = arith.constant 0 : i32
    %c0_i32_1 = arith.constant 0 : i32
    return %c0_i32, %c0_i32_0 : i32, i32
  }
  func.func @transform_1(%arg0: i32) -> (i32, i32) {
    %c0_i32 = arith.constant 0 : i32
    %c0_i32_0 = arith.constant 0 : i32
    %c0_i32_1 = arith.constant 0 : i32
    return %c0_i32, %c0_i32_0 : i32, i32
  }
}

module attributes {stable_mosaic.version = 11 : i64} {
  func.func @_affine_kernel(%arg0: i32, %arg1: memref<8x768xbf16, #tpu.memory_space<vmem>>, %arg2: memref<768x768xbf16, #tpu.memory_space<vmem>>, %arg3: memref<1x768xf32, #tpu.memory_space<vmem>>, %arg4: memref<8x768xbf16, #tpu.memory_space<vmem>>) attributes {dimension_semantics = [#tpu.dimension_semantics<parallel>], iteration_bounds = array<i64: 1>, scalar_prefetch = 0 : i64, scratch_operands = 0 : i64, tpu.core_type = #tpu.core_type<tc>, window_params = [{transform_indices = @transform_0, window_bounds = array<i64: 8, 768>}, {pipeline_mode = #tpu.pipeline_mode<synchronous>, transform_indices = @transform_1, window_bounds = array<i64: 768, 768>}, {pipeline_mode = #tpu.pipeline_mode<synchronous>, transform_indices = @transform_2, window_bounds = array<i64: 1, 768>}, {transform_indices = @transform_3, window_bounds = array<i64: 8, 768>}]} {
    %c0 = arith.constant 0 : index
    %c0_0 = arith.constant 0 : index
    %0 = vector.load %arg1[%c0, %c0_0] : memref<8x768xbf16, #tpu.memory_space<vmem>>, vector<8x768xbf16>
    %c0_1 = arith.constant 0 : index
    %c0_2 = arith.constant 0 : index
    %1 = vector.load %arg2[%c0_1, %c0_2] : memref<768x768xbf16, #tpu.memory_space<vmem>>, vector<768x768xbf16>
    %cst = arith.constant dense<0.000000e+00> : vector<8x768xf32>
    %2 = tpu.matmul %0, %1, %cst {dimension_numbers = #tpu.dot_dimension_numbers<[1], [0], [0], [1], [0, 0, 1, 1], [], []>} : vector<8x768xbf16>, vector<768x768xbf16>, vector<8x768xf32> -> vector<8x768xf32>
    %c0_3 = arith.constant 0 : index
    %c0_4 = arith.constant 0 : index
    %3 = vector.load %arg3[%c0_3, %c0_4] : memref<1x768xf32, #tpu.memory_space<vmem>>, vector<1x768xf32>
    %4 = vector.broadcast %3 : vector<1x768xf32> to vector<8x768xf32>
    %5 = arith.addf %2, %4 : vector<8x768xf32>
    %6 = math.tanh %5 : vector<8x768xf32>
    %7 = arith.truncf %6 : vector<8x768xf32> to vector<8x768xbf16>
    %c0_5 = arith.constant 0 : index
    %c0_6 = arith.constant 0 : index
    %8 = vector.load %arg4[%c0_5, %c0_6] : memref<8x768xbf16, #tpu.memory_space<vmem>>, vector<8x768xbf16>
    tpu.vector_store %arg4[%c0_5, %c0_6], %7 {strides = array<i32>} : memref<8x768xbf16, #tpu.memory_space<vmem>>, vector<8x768xbf16>,
    return
  }
  func.func @transform_0(%arg0: i32) -> (i32, i32) {
    %c0_i32 = arith.constant 0 : i32
    %c0_i32_0 = arith.constant 0 : i32
    return %arg0, %c0_i32 : i32, i32
  }
  func.func @transform_1(%arg0: i32) -> (i32, i32) {
    %c0_i32 = arith.constant 0 : i32
    %c0_i32_0 = arith.constant 0 : i32
    %c0_i32_1 = arith.constant 0 : i32
    return %c0_i32, %c0_i32_0 : i32, i32
  }
  func.func @transform_2(%arg0: i32) -> (i32, i32) {
    %c0_i32 = arith.constant 0 : i32
    %c0_i32_0 = arith.constant 0 : i32
    %c0_i32_1 = arith.constant 0 : i32
    return %c0_i32, %c0_i32_0 : i32, i32
  }
  func.func @transform_3(%arg0: i32) -> (i32, i32) {
    %c0_i32 = arith.constant 0 : i32
    %c0_i32_0 = arith.constant 0 : i32
    return %arg0, %c0_i32 : i32, i32
  }
}

</mosaic_0001>

<llo_original>
// kernel: tpu_custom_call.1
$region0: #{tpu_custom_call.1}
  #allocation0 [shape = 'u32[]', space=smem, size = 0x4, offset = 0x4, fixed_abs, tag = 'smem constant byte address 0x4 - core index']
  #allocation1 [shape = 'u32[144,128]{1,0:T(1,128)}', space=vmem, size = 0x12000, scoped, tag = 'internal scratch']
  %s0 = inlined_call_operand.hbm [shape: f32[8,128], index: 0, kind: input, shape index: {}]
  %s1 = inlined_call_operand.hbm [shape: f32[8,128], index: 1, kind: output, shape index: {}]
  %s2 = sld [smem:[#allocation0]]
  $region18: #{tpu_custom_call.1} parent=0
    _
  %s4 = ssub.s32 1, %s2
  %s5 = scalar_select 0, %s4, %s2
  $region1: #{tpu_custom_call.1} parent=0
    #allocation2 [shape = 'u8[4096]{0}', space=vmem, size = 0x1000, scoped, tag = 'input window, operand 0, single buffered']
    #allocation3 [shape = 's32[1]{0}', space=sflag, size = 0x4, scoped, tag = 'scoped memory for tpu_custom_call.1']
    #allocation4 [shape = 's32[1]{0}', space=sflag, size = 0x4, scoped, tag = 'scoped memory for tpu_custom_call.1']
    #allocation5 [shape = 'u8[4096]{0}', space=vmem, size = 0x1000, scoped, tag = 'output window, operand 0, single buffered']
    %6 = vsyncpa [#allocation3], 0
    %7 = vsyncpa [#allocation4], 0
    // Predicated region
    $region2: #{tpu_custom_call.1} parent=1 // pred_check
      _
    $region3: #{tpu_custom_call.1} parent=1 // pred_check_branch
      %9 = sbr.rel (0) target = $region5
    $region4: #{tpu_custom_call.1} parent=1 // pred_region
      %s11 = ssub.s32 128, 128
      %12 = vsyncadd [#allocation3], %s11
      %s14 = sshll.u32 [#allocation2], 4
      %s15 = int_to_ptr.vmem [resolvable:$true] %s14
      %17 = dma.hbm_to_vmem [thread:$0]  %s0, 128, %s15, [#allocation3]
    $region5: #{tpu_custom_call.1} parent=1 // pred_fallthru
      _
    // Predicated region
    $region6: #{tpu_custom_call.1} parent=1 // pred_check
      _
    $region7: #{tpu_custom_call.1} parent=1 // pred_check_branch
      %19 = sbr.rel (0) target = $region9
    $region8: #{tpu_custom_call.1} parent=1 // pred_region
      %20 = dma.done [#allocation3], 128
    $region9: #{tpu_custom_call.1} parent=1 // pred_fallthru
      _
    %v21 = vld [vmem:[#allocation2] sm:$0xff]
    %v22 = vadd.f32 %v21, 1.0
    %23 = vst [vmem:[#allocation5] sm:$0xff] %v22
    // Predicated region
    $region10: #{tpu_custom_call.1} parent=1 // pred_check
      _
    $region11: #{tpu_custom_call.1} parent=1 // pred_check_branch
      %25 = sbr.rel (0) target = $region13
    $region12: #{tpu_custom_call.1} parent=1 // pred_region
      %s27 = ssub.s32 128, 128
      %28 = vsyncadd [#allocation4], %s27
      %s30 = sshll.u32 [#allocation5], 4
      %s31 = int_to_ptr.vmem [resolvable:$true] %s30
      %33 = dma.vmem_to_hbm [thread:$0]  %s31, 128, %s1, [#allocation4]
    $region13: #{tpu_custom_call.1} parent=1 // pred_fallthru
      _
    // Predicated region
    $region14: #{tpu_custom_call.1} parent=1 // pred_check
      _
    $region15: #{tpu_custom_call.1} parent=1 // pred_check_branch
      %35 = sbr.rel (0) target = $region17
    $region16: #{tpu_custom_call.1} parent=1 // pred_region
      %36 = dma.done [#allocation4], 128
    $region17: #{tpu_custom_call.1} parent=1 // pred_fallthru
      _
    %37 = vsyncpa [#allocation3], 1
    %38 = vsyncpa [#allocation4], 1

// kernel: tpu_custom_call.1
$region0: #{tpu_custom_call.1}
  #allocation0 [shape = 'u32[]', space=smem, size = 0x4, offset = 0x4, fixed_abs, tag = 'smem constant byte address 0x4 - core index']
  #allocation1 [shape = 'u32[144,128]{1,0:T(1,128)}', space=vmem, size = 0x12000, scoped, tag = 'internal scratch']
  %s0 = inlined_call_operand.hbm [shape: bf16[8,768], index: 0, kind: input, shape index: {}]
  %s1 = inlined_call_operand.hbm [shape: bf16[768,768], index: 1, kind: input, shape index: {}]
  %s2 = inlined_call_operand.hbm [shape: f32[1,768], index: 2, kind: input, shape index: {}]
  %s3 = inlined_call_operand.hbm [shape: bf16[8,768], index: 3, kind: output, shape index: {}]
  %s4 = sld [smem:[#allocation0]]
  $region34: #{tpu_custom_call.1} parent=0
    _
  %s6 = ssub.s32 1, %s4
  %s7 = scalar_select 0, %s6, %s4
  $region1: #{tpu_custom_call.1} parent=0
    #allocation2 [shape = 'u8[12288]{0}', space=vmem, size = 0x3000, scoped, tag = 'input window, operand 0, single buffered']
    #allocation3 [shape = 's32[1]{0}', space=sflag, size = 0x4, scoped, tag = 'scoped memory for tpu_custom_call.1']
    #allocation4 [shape = 's32[1]{0}', space=sflag, size = 0x4, scoped, tag = 'scoped memory for tpu_custom_call.1']
    #allocation5 [shape = 'u8[1179648]{0}', space=vmem, size = 0x120000, scoped, tag = 'input window, operand 1, single buffered']
    #allocation6 [shape = 's32[1]{0}', space=sflag, size = 0x4, scoped, tag = 'scoped memory for tpu_custom_call.1']
    #allocation7 [shape = 'u8[3072]{0}', space=vmem, size = 0xc00, scoped, tag = 'input window, operand 2, single buffered']
    #allocation8 [shape = 'u8[12288]{0}', space=vmem, size = 0x3000, scoped, tag = 'output window, operand 0, single buffered']
    %8 = vsyncpa [#allocation3], 0
    %9 = vsyncpa [#allocation6], 0
    %10 = vsyncpa [#allocation4], 0
    // Predicated region
    $region2: #{tpu_custom_call.1} parent=1 // pred_check
      _
    $region3: #{tpu_custom_call.1} parent=1 // pred_check_branch
      %12 = sbr.rel (0) target = $region5
    $region4: #{tpu_custom_call.1} parent=1 // pred_region
      %s14 = ssub.s32 384, 384
      %15 = vsyncadd [#allocation3], %s14
      %s17 = sshll.u32 [#allocation2], 4
      %s18 = int_to_ptr.vmem [resolvable:$true] %s17
      %20 = dma.hbm_to_vmem [thread:$0]  %s0, 384, %s18, [#allocation3]
    $region5: #{tpu_custom_call.1} parent=1 // pred_fallthru
      _
    // Predicated region
    $region6: #{tpu_custom_call.1} parent=1 // pred_check
      _
    $region7: #{tpu_custom_call.1} parent=1 // pred_check_branch
      %22 = sbr.rel (0) target = $region9
    $region8: #{tpu_custom_call.1} parent=1 // pred_region
      %s24 = ssub.s32 36864, 36864
      %25 = vsyncadd [#allocation6], %s24
      %s26 = sshll.u32 [#allocation5], 4
      %s27 = int_to_ptr.vmem [resolvable:$true] %s26
      %32 = dma.hbm_to_vmem [thread:$0]  %s1, 36864, %s27, [#allocation6], 384, 384, 24
    $region9: #{tpu_custom_call.1} parent=1 // pred_fallthru
      _
    // Predicated region
    $region10: #{tpu_custom_call.1} parent=1 // pred_check
      _
    $region11: #{tpu_custom_call.1} parent=1 // pred_check_branch
      %34 = sbr.rel (0) target = $region13
    $region12: #{tpu_custom_call.1} parent=1 // pred_region
      %s36 = ssub.s32 96, 96
      %37 = vsyncadd [#allocation6], %s36
      %s39 = sshll.u32 [#allocation7], 4
      %s40 = int_to_ptr.vmem [resolvable:$true] %s39
      %42 = dma.hbm_to_vmem [thread:$0]  %s2, 96, %s40, [#allocation6]
    $region13: #{tpu_custom_call.1} parent=1 // pred_fallthru
      _
    // Predicated region
    $region14: #{tpu_custom_call.1} parent=1 // pred_check
      _
    $region15: #{tpu_custom_call.1} parent=1 // pred_check_branch
      %44 = sbr.rel (0) target = $region17
    $region16: #{tpu_custom_call.1} parent=1 // pred_region
      %45 = dma.done [#allocation3], 384
    $region17: #{tpu_custom_call.1} parent=1 // pred_fallthru
      _
    // Predicated region
    $region18: #{tpu_custom_call.1} parent=1 // pred_check
      _
    $region19: #{tpu_custom_call.1} parent=1 // pred_check_branch
      %47 = sbr.rel (0) target = $region21
    $region20: #{tpu_custom_call.1} parent=1 // pred_region
      %48 = dma.done [#allocation6], 36864
    $region21: #{tpu_custom_call.1} parent=1 // pred_fallthru
      _
    // Predicated region
    $region22: #{tpu_custom_call.1} parent=1 // pred_check
      _
    $region23: #{tpu_custom_call.1} parent=1 // pred_check_branch
      %50 = sbr.rel (0) target = $region25
    $region24: #{tpu_custom_call.1} parent=1 // pred_region
      %51 = dma.done [#allocation6], 96
    $region25: #{tpu_custom_call.1} parent=1 // pred_fallthru
      _
    %v52 = vld [vmem:[#allocation2] sm:$0xff]
    %v53 = vld [vmem:[#allocation2 + $0x8] sm:$0xff]
    %v54 = vld [vmem:[#allocation2 + $0x10] sm:$0xff]
    %v55 = vld [vmem:[#allocation5] sm:$0xff]
    %v56 = vld [vmem:[#allocation5 + $0x8] sm:$0xff]
    %v57 = vld [vmem:[#allocation5 + $0x10] sm:$0xff]
    %v58 = vld [vmem:[#allocation5 + $0x18] sm:$0xff]
    %v59 = vld [vmem:[#allocation5 + $0x20] sm:$0xff]
    %v60 = vld [vmem:[#allocation5 + $0x28] sm:$0xff]
    %v61 = vld [vmem:[#allocation5 + $0x30] sm:$0xff]
    %v62 = vld [vmem:[#allocation5 + $0x38] sm:$0xff]
    %v63 = vld [vmem:[#allocation5 + $0x40] sm:$0xff]
    %v64 = vld [vmem:[#allocation5 + $0x48] sm:$0xff]
    %v65 = vld [vmem:[#allocation5 + $0x50] sm:$0xff]
    %v66 = vld [vmem:[#allocation5 + $0x58] sm:$0xff]
    %v67 = vld [vmem:[#allocation5 + $0x60] sm:$0xff]
    %v68 = vld [vmem:[#allocation5 + $0x68] sm:$0xff]
    %v69 = vld [vmem:[#allocation5 + $0x70] sm:$0xff]
    %v70 = vld [vmem:[#allocation5 + $0x78] sm:$0xff]
    %v71 = vld [vmem:[#allocation5 + $0x80] sm:$0xff]
    %v72 = vld [vmem:[#allocation5 + $0x88] sm:$0xff]
    %v73 = vld [vmem:[#allocation5 + $0x90] sm:$0xff]
    %v74 = vld [vmem:[#allocation5 + $0x98] sm:$0xff]
    %v75 = vld [vmem:[#allocation5 + $0xa0] sm:$0xff]
    %v76 = vld [vmem:[#allocation5 + $0xa8] sm:$0xff]
    %v77 = vld [vmem:[#allocation5 + $0xb0] sm:$0xff]
    %v78 = vld [vmem:[#allocation5 + $0xb8] sm:$0xff]
    %v79 = vld [vmem:[#allocation5 + $0xc0] sm:$0xff]
    %v80 = vld [vmem:[#allocation5 + $0xc8] sm:$0xff]
    %v81 = vld [vmem:[#allocation5 + $0xd0] sm:$0xff]
    %v82 = vld [vmem:[#allocation5 + $0xd8] sm:$0xff]
    %v83 = vld [vmem:[#allocation5 + $0xe0] sm:$0xff]
    %v84 = vld [vmem:[#allocation5 + $0xe8] sm:$0xff]
    %v85 = vld [vmem:[#allocation5 + $0xf0] sm:$0xff]
    %v86 = vld [vmem:[#allocation5 + $0xf8] sm:$0xff]
    %v87 = vld [vmem:[#allocation5 + $0x100] sm:$0xff]
    %v88 = vld [vmem:[#allocation5 + $0x108] sm:$0xff]
    %v89 = vld [vmem:[#allocation5 + $0x110] sm:$0xff]
    %v90 = vld [vmem:[#allocation5 + $0x118] sm:$0xff]
    %v91 = vld [vmem:[#allocation5 + $0x120] sm:$0xff]
    %v92 = vld [vmem:[#allocation5 + $0x128] sm:$0xff]
    %v93 = vld [vmem:[#allocation5 + $0x130] sm:$0xff]
    %v94 = vld [vmem:[#allocation5 + $0x138] sm:$0xff]
    %v95 = vld [vmem:[#allocation5 + $0x140] sm:$0xff]
    %v96 = vld [vmem:[#allocation5 + $0x148] sm:$0xff]
    %v97 = vld [vmem:[#allocation5 + $0x150] sm:$0xff]
    %v98 = vld [vmem:[#allocation5 + $0x158] sm:$0xff]
    %v99 = vld [vmem:[#allocation5 + $0x160] sm:$0xff]
    %v100 = vld [vmem:[#allocation5 + $0x168] sm:$0xff]
    %v101 = vld [vmem:[#allocation5 + $0x170] sm:$0xff]
    %v102 = vld [vmem:[#allocation5 + $0x178] sm:$0xff]
    %v103 = vld [vmem:[#allocation5 + $0x180] sm:$0xff]
    %v104 = vld [vmem:[#allocation5 + $0x188] sm:$0xff]
    %v105 = vld [vmem:[#allocation5 + $0x190] sm:$0xff]
    %v106 = vld [vmem:[#allocation5 + $0x198] sm:$0xff]
    %v107 = vld [vmem:[#allocation5 + $0x1a0] sm:$0xff]
    %v108 = vld [vmem:[#allocation5 + $0x1a8] sm:$0xff]
    %v109 = vld [vmem:[#allocation5 + $0x1b0] sm:$0xff]
    %v110 = vld [vmem:[#allocation5 + $0x1b8] sm:$0xff]
    %v111 = vld [vmem:[#allocation5 + $0x1c0] sm:$0xff]
    %v112 = vld [vmem:[#allocation5 + $0x1c8] sm:$0xff]
    %v113 = vld [vmem:[#allocation5 + $0x1d0] sm:$0xff]
    %v114 = vld [vmem:[#allocation5 + $0x1d8] sm:$0xff]
    %v115 = vld [vmem:[#allocation5 + $0x1e0] sm:$0xff]
    %v116 = vld [vmem:[#allocation5 + $0x1e8] sm:$0xff]
    %v117 = vld [vmem:[#allocation5 + $0x1f0] sm:$0xff]
    %v118 = vld [vmem:[#allocation5 + $0x1f8] sm:$0xff]
    %v119 = vld [vmem:[#allocation5 + $0x200] sm:$0xff]
    %v120 = vld [vmem:[#allocation5 + $0x208] sm:$0xff]
    %v121 = vld [vmem:[#allocation5 + $0x210] sm:$0xff]
    %v122 = vld [vmem:[#allocation5 + $0x218] sm:$0xff]
    %v123 = vld [vmem:[#allocation5 + $0x220] sm:$0xff]
    %v124 = vld [vmem:[#allocation5 + $0x228] sm:$0xff]
    %v125 = vld [vmem:[#allocation5 + $0x230] sm:$0xff]
    %v126 = vld [vmem:[#allocation5 + $0x238] sm:$0xff]
    %v127 = vld [vmem:[#allocation5 + $0x240] sm:$0xff]
    %v128 = vld [vmem:[#allocation5 + $0x248] sm:$0xff]
    %v129 = vld [vmem:[#allocation5 + $0x250] sm:$0xff]
    %v130 = vld [vmem:[#allocation5 + $0x258] sm:$0xff]
    %v131 = vld [vmem:[#allocation5 + $0x260] sm:$0xff]
    %v132 = vld [vmem:[#allocation5 + $0x268] sm:$0xff]
    %v133 = vld [vmem:[#allocation5 + $0x270] sm:$0xff]
    %v134 = vld [vmem:[#allocation5 + $0x278] sm:$0xff]
    %v135 = vld [vmem:[#allocation5 + $0x280] sm:$0xff]
    %v136 = vld [vmem:[#allocation5 + $0x288] sm:$0xff]
    %v137 = vld [vmem:[#allocation5 + $0x290] sm:$0xff]
    %v138 = vld [vmem:[#allocation5 + $0x298] sm:$0xff]
    %v139 = vld [vmem:[#allocation5 + $0x2a0] sm:$0xff]
    %v140 = vld [vmem:[#allocation5 + $0x2a8] sm:$0xff]
    %v141 = vld [vmem:[#allocation5 + $0x2b0] sm:$0xff]
    %v142 = vld [vmem:[#allocation5 + $0x2b8] sm:$0xff]
    %v143 = vld [vmem:[#allocation5 + $0x2c0] sm:$0xff]
    %v144 = vld [vmem:[#allocation5 + $0x2c8] sm:$0xff]
    %v145 = vld [vmem:[#allocation5 + $0x2d0] sm:$0xff]
    %v146 = vld [vmem:[#allocation5 + $0x2d8] sm:$0xff]
    %v147 = vld [vmem:[#allocation5 + $0x2e0] sm:$0xff]
    %v148 = vld [vmem:[#allocation5 + $0x2e8] sm:$0xff]
    %v149 = vld [vmem:[#allocation5 + $0x2f0] sm:$0xff]
    %v150 = vld [vmem:[#allocation5 + $0x2f8] sm:$0xff]
    %v151 = vld [vmem:[#allocation5 + $0x300] sm:$0xff]
    %v152 = vld [vmem:[#allocation5 + $0x308] sm:$0xff]
    %v153 = vld [vmem:[#allocation5 + $0x310] sm:$0xff]
    %v154 = vld [vmem:[#allocation5 + $0x318] sm:$0xff]
    %v155 = vld [vmem:[#allocation5 + $0x320] sm:$0xff]
    %v156 = vld [vmem:[#allocation5 + $0x328] sm:$0xff]
    %v157 = vld [vmem:[#allocation5 + $0x330] sm:$0xff]
    %v158 = vld [vmem:[#allocation5 + $0x338] sm:$0xff]
    %v159 = vld [vmem:[#allocation5 + $0x340] sm:$0xff]
    %v160 = vld [vmem:[#allocation5 + $0x348] sm:$0xff]
    %v161 = vld [vmem:[#allocation5 + $0x350] sm:$0xff]
    %v162 = vld [vmem:[#allocation5 + $0x358] sm:$0xff]
    %v163 = vld [vmem:[#allocation5 + $0x360] sm:$0xff]
    %v164 = vld [vmem:[#allocation5 + $0x368] sm:$0xff]
    %v165 = vld [vmem:[#allocation5 + $0x370] sm:$0xff]
    %v166 = vld [vmem:[#allocation5 + $0x378] sm:$0xff]
    %v167 = vld [vmem:[#allocation5 + $0x380] sm:$0xff]
    %v168 = vld [vmem:[#allocation5 + $0x388] sm:$0xff]
    %v169 = vld [vmem:[#allocation5 + $0x390] sm:$0xff]
    %v170 = vld [vmem:[#allocation5 + $0x398] sm:$0xff]
    %v171 = vld [vmem:[#allocation5 + $0x3a0] sm:$0xff]
    %v172 = vld [vmem:[#allocation5 + $0x3a8] sm:$0xff]
    %v173 = vld [vmem:[#allocation5 + $0x3b0] sm:$0xff]
    %v174 = vld [vmem:[#allocation5 + $0x3b8] sm:$0xff]
    %v175 = vld [vmem:[#allocation5 + $0x3c0] sm:$0xff]
    %v176 = vld [vmem:[#allocation5 + $0x3c8] sm:$0xff]
    %v177 = vld [vmem:[#allocation5 + $0x3d0] sm:$0xff]
    %v178 = vld [vmem:[#allocation5 + $0x3d8] sm:$0xff]
    %v179 = vld [vmem:[#allocation5 + $0x3e0] sm:$0xff]
    %v180 = vld [vmem:[#allocation5 + $0x3e8] sm:$0xff]
    %v181 = vld [vmem:[#allocation5 + $0x3f0] sm:$0xff]
    %v182 = vld [vmem:[#allocation5 + $0x3f8] sm:$0xff]
    %v183 = vld [vmem:[#allocation5 + $0x400] sm:$0xff]
    %v184 = vld [vmem:[#allocation5 + $0x408] sm:$0xff]
    %v185 = vld [vmem:[#allocation5 + $0x410] sm:$0xff]
    %v186 = vld [vmem:[#allocation5 + $0x418] sm:$0xff]
    %v187 = vld [vmem:[#allocation5 + $0x420] sm:$0xff]
    %v188 = vld [vmem:[#allocation5 + $0x428] sm:$0xff]
    %v189 = vld [vmem:[#allocation5 + $0x430] sm:$0xff]
    %v190 = vld [vmem:[#allocation5 + $0x438] sm:$0xff]
    %v191 = vld [vmem:[#allocation5 + $0x440] sm:$0xff]
    %v192 = vld [vmem:[#allocation5 + $0x448] sm:$0xff]
    %v193 = vld [vmem:[#allocation5 + $0x450] sm:$0xff]
    %v194 = vld [vmem:[#allocation5 + $0x458] sm:$0xff]
    %v195 = vld [vmem:[#allocation5 + $0x460] sm:$0xff]
    %v196 = vld [vmem:[#allocation5 + $0x468] sm:$0xff]
    %v197 = vld [vmem:[#allocation5 + $0x470] sm:$0xff]
    %v198 = vld [vmem:[#allocation5 + $0x478] sm:$0xff]
    %v199 = vld [vmem:[#allocation5 + $0x480] sm:$0xff]
    %v200 = vld [vmem:[#allocation5 + $0x488] sm:$0xff]
    %v201 = vld [vmem:[#allocation5 + $0x490] sm:$0xff]
    %v202 = vld [vmem:[#allocation5 + $0x498] sm:$0xff]
    %v203 = vld [vmem:[#allocation5 + $0x4a0] sm:$0xff]
    %v204 = vld [vmem:[#allocation5 + $0x4a8] sm:$0xff]
    %v205 = vld [vmem:[#allocation5 + $0x4b0] sm:$0xff]
    %v206 = vld [vmem:[#allocation5 + $0x4b8] sm:$0xff]
    %v207 = vld [vmem:[#allocation5 + $0x4c0] sm:$0xff]
    %v208 = vld [vmem:[#allocation5 + $0x4c8] sm:$0xff]
    %v209 = vld [vmem:[#allocation5 + $0x4d0] sm:$0xff]
    %v210 = vld [vmem:[#allocation5 + $0x4d8] sm:$0xff]
    %v211 = vld [vmem:[#allocation5 + $0x4e0] sm:$0xff]
    %v212 = vld [vmem:[#allocation5 + $0x4e8] sm:$0xff]
    %v213 = vld [vmem:[#allocation5 + $0x4f0] sm:$0xff]
    %v214 = vld [vmem:[#allocation5 + $0x4f8] sm:$0xff]
    %v215 = vld [vmem:[#allocation5 + $0x500] sm:$0xff]
    %v216 = vld [vmem:[#allocation5 + $0x508] sm:$0xff]
    %v217 = vld [vmem:[#allocation5 + $0x510] sm:$0xff]
    %v218 = vld [vmem:[#allocation5 + $0x518] sm:$0xff]
    %v219 = vld [vmem:[#allocation5 + $0x520] sm:$0xff]
    %v220 = vld [vmem:[#allocation5 + $0x528] sm:$0xff]
    %v221 = vld [vmem:[#allocation5 + $0x530] sm:$0xff]
    %v222 = vld [vmem:[#allocation5 + $0x538] sm:$0xff]
    %v223 = vld [vmem:[#allocation5 + $0x540] sm:$0xff]
    %v224 = vld [vmem:[#allocation5 + $0x548] sm:$0xff]
    %v225 = vld [vmem:[#allocation5 + $0x550] sm:$0xff]
    %v226 = vld [vmem:[#allocation5 + $0x558] sm:$0xff]
    %v227 = vld [vmem:[#allocation5 + $0x560] sm:$0xff]
    %v228 = vld [vmem:[#allocation5 + $0x568] sm:$0xff]
    %v229 = vld [vmem:[#allocation5 + $0x570] sm:$0xff]
    %v230 = vld [vmem:[#allocation5 + $0x578] sm:$0xff]
    %v231 = vld [vmem:[#allocation5 + $0x580] sm:$0xff]
    %v232 = vld [vmem:[#allocation5 + $0x588] sm:$0xff]
    %v233 = vld [vmem:[#allocation5 + $0x590] sm:$0xff]
    %v234 = vld [vmem:[#allocation5 + $0x598] sm:$0xff]
    %v235 = vld [vmem:[#allocation5 + $0x5a0] sm:$0xff]
    %v236 = vld [vmem:[#allocation5 + $0x5a8] sm:$0xff]
    %v237 = vld [vmem:[#allocation5 + $0x5b0] sm:$0xff]
    %v238 = vld [vmem:[#allocation5 + $0x5b8] sm:$0xff]
    %v239 = vld [vmem:[#allocation5 + $0x5c0] sm:$0xff]
    %v240 = vld [vmem:[#allocation5 + $0x5c8] sm:$0xff]
    %v241 = vld [vmem:[#allocation5 + $0x5d0] sm:$0xff]
    %v242 = vld [vmem:[#allocation5 + $0x5d8] sm:$0xff]
    %v243 = vld [vmem:[#allocation5 + $0x5e0] sm:$0xff]
    %v244 = vld [vmem:[#allocation5 + $0x5e8] sm:$0xff]
    %v245 = vld [vmem:[#allocation5 + $0x5f0] sm:$0xff]
    %v246 = vld [vmem:[#allocation5 + $0x5f8] sm:$0xff]
    %v247 = vld [vmem:[#allocation5 + $0x600] sm:$0xff]
    %v248 = vld [vmem:[#allocation5 + $0x608] sm:$0xff]
    %v249 = vld [vmem:[#allocation5 + $0x610] sm:$0xff]
    %v250 = vld [vmem:[#allocation5 + $0x618] sm:$0xff]
    %v251 = vld [vmem:[#allocation5 + $0x620] sm:$0xff]
    %v252 = vld [vmem:[#allocation5 + $0x628] sm:$0xff]
    %v253 = vld [vmem:[#allocation5 + $0x630] sm:$0xff]
    %v254 = vld [vmem:[#allocation5 + $0x638] sm:$0xff]
    %v255 = vld [vmem:[#allocation5 + $0x640] sm:$0xff]
    %v256 = vld [vmem:[#allocation5 + $0x648] sm:$0xff]
    %v257 = vld [vmem:[#allocation5 + $0x650] sm:$0xff]
    %v258 = vld [vmem:[#allocation5 + $0x658] sm:$0xff]
    %v259 = vld [vmem:[#allocation5 + $0x660] sm:$0xff]
    %v260 = vld [vmem:[#allocation5 + $0x668] sm:$0xff]
    %v261 = vld [vmem:[#allocation5 + $0x670] sm:$0xff]
    %v262 = vld [vmem:[#allocation5 + $0x678] sm:$0xff]
    %v263 = vld [vmem:[#allocation5 + $0x680] sm:$0xff]
    %v264 = vld [vmem:[#allocation5 + $0x688] sm:$0xff]
    %v265 = vld [vmem:[#allocation5 + $0x690] sm:$0xff]
    %v266 = vld [vmem:[#allocation5 + $0x698] sm:$0xff]
    %v267 = vld [vmem:[#allocation5 + $0x6a0] sm:$0xff]
    %v268 = vld [vmem:[#allocation5 + $0x6a8] sm:$0xff]
    %v269 = vld [vmem:[#allocation5 + $0x6b0] sm:$0xff]
    %v270 = vld [vmem:[#allocation5 + $0x6b8] sm:$0xff]
    %v271 = vld [vmem:[#allocation5 + $0x6c0] sm:$0xff]
    %v272 = vld [vmem:[#allocation5 + $0x6c8] sm:$0xff]
    %v273 = vld [vmem:[#allocation5 + $0x6d0] sm:$0xff]
    %v274 = vld [vmem:[#allocation5 + $0x6d8] sm:$0xff]
    %v275 = vld [vmem:[#allocation5 + $0x6e0] sm:$0xff]
    %v276 = vld [vmem:[#allocation5 + $0x6e8] sm:$0xff]
    %v277 = vld [vmem:[#allocation5 + $0x6f0] sm:$0xff]
    %v278 = vld [vmem:[#allocation5 + $0x6f8] sm:$0xff]
    %v279 = vld [vmem:[#allocation5 + $0x700] sm:$0xff]
    %v280 = vld [vmem:[#allocation5 + $0x708] sm:$0xff]
    %v281 = vld [vmem:[#allocation5 + $0x710] sm:$0xff]
    %v282 = vld [vmem:[#allocation5 + $0x718] sm:$0xff]
    %v283 = vld [vmem:[#allocation5 + $0x720] sm:$0xff]
    %v284 = vld [vmem:[#allocation5 + $0x728] sm:$0xff]
    %v285 = vld [vmem:[#allocation5 + $0x730] sm:$0xff]
    %v286 = vld [vmem:[#allocation5 + $0x738] sm:$0xff]
    %v287 = vld [vmem:[#allocation5 + $0x740] sm:$0xff]
    %v288 = vld [vmem:[#allocation5 + $0x748] sm:$0xff]
    %v289 = vld [vmem:[#allocation5 + $0x750] sm:$0xff]
    %v290 = vld [vmem:[#allocation5 + $0x758] sm:$0xff]
    %v291 = vld [vmem:[#allocation5 + $0x760] sm:$0xff]
    %v292 = vld [vmem:[#allocation5 + $0x768] sm:$0xff]
    %v293 = vld [vmem:[#allocation5 + $0x770] sm:$0xff]
    %v294 = vld [vmem:[#allocation5 + $0x778] sm:$0xff]
    %v295 = vld [vmem:[#allocation5 + $0x780] sm:$0xff]
    %v296 = vld [vmem:[#allocation5 + $0x788] sm:$0xff]
    %v297 = vld [vmem:[#allocation5 + $0x790] sm:$0xff]
    %v298 = vld [vmem:[#allocation5 + $0x798] sm:$0xff]
    %v299 = vld [vmem:[#allocation5 + $0x7a0] sm:$0xff]
    %v300 = vld [vmem:[#allocation5 + $0x7a8] sm:$0xff]
    %v301 = vld [vmem:[#allocation5 + $0x7b0] sm:$0xff]
    %v302 = vld [vmem:[#allocation5 + $0x7b8] sm:$0xff]
    %v303 = vld [vmem:[#allocation5 + $0x7c0] sm:$0xff]
    %v304 = vld [vmem:[#allocation5 + $0x7c8] sm:$0xff]
    %v305 = vld [vmem:[#allocation5 + $0x7d0] sm:$0xff]
    %v306 = vld [vmem:[#allocation5 + $0x7d8] sm:$0xff]
    %v307 = vld [vmem:[#allocation5 + $0x7e0] sm:$0xff]
    %v308 = vld [vmem:[#allocation5 + $0x7e8] sm:$0xff]
    %v309 = vld [vmem:[#allocation5 + $0x7f0] sm:$0xff]
    %v310 = vld [vmem:[#allocation5 + $0x7f8] sm:$0xff]
    %v311 = vld [vmem:[#allocation5 + $0x800] sm:$0xff]
    %v312 = vld [vmem:[#allocation5 + $0x808] sm:$0xff]
    %v313 = vld [vmem:[#allocation5 + $0x810] sm:$0xff]
    %v314 = vld [vmem:[#allocation5 + $0x818] sm:$0xff]
    %v315 = vld [vmem:[#allocation5 + $0x820] sm:$0xff]
    %v316 = vld [vmem:[#allocation5 + $0x828] sm:$0xff]
    %v317 = vld [vmem:[#allocation5 + $0x830] sm:$0xff]
    %v318 = vld [vmem:[#allocation5 + $0x838] sm:$0xff]
    %v319 = vld [vmem:[#allocation5 + $0x840] sm:$0xff]
    %v320 = vld [vmem:[#allocation5 + $0x848] sm:$0xff]
    %v321 = vld [vmem:[#allocation5 + $0x850] sm:$0xff]
    %v322 = vld [vmem:[#allocation5 + $0x858] sm:$0xff]
    %v323 = vld [vmem:[#allocation5 + $0x860] sm:$0xff]
    %v324 = vld [vmem:[#allocation5 + $0x868] sm:$0xff]
    %v325 = vld [vmem:[#allocation5 + $0x870] sm:$0xff]
    %v326 = vld [vmem:[#allocation5 + $0x878] sm:$0xff]
    %v327 = vld [vmem:[#allocation5 + $0x880] sm:$0xff]
    %v328 = vld [vmem:[#allocation5 + $0x888] sm:$0xff]
    %v329 = vld [vmem:[#allocation5 + $0x890] sm:$0xff]
    %v330 = vld [vmem:[#allocation5 + $0x898] sm:$0xff]
    %v331 = vld [vmem:[#allocation5 + $0x8a0] sm:$0xff]
    %v332 = vld [vmem:[#allocation5 + $0x8a8] sm:$0xff]
    %v333 = vld [vmem:[#allocation5 + $0x8b0] sm:$0xff]
    %v334 = vld [vmem:[#allocation5 + $0x8b8] sm:$0xff]
    %v335 = vld [vmem:[#allocation5 + $0x8c0] sm:$0xff]
    %v336 = vld [vmem:[#allocation5 + $0x8c8] sm:$0xff]
    %v337 = vld [vmem:[#allocation5 + $0x8d0] sm:$0xff]
    %v338 = vld [vmem:[#allocation5 + $0x8d8] sm:$0xff]
    %v339 = vld [vmem:[#allocation5 + $0x8e0] sm:$0xff]
    %v340 = vld [vmem:[#allocation5 + $0x8e8] sm:$0xff]
    %v341 = vld [vmem:[#allocation5 + $0x8f0] sm:$0xff]
    %v342 = vld [vmem:[#allocation5 + $0x8f8] sm:$0xff]
    %v343 = vld [vmem:[#allocation7] sm:$0x3f]
    %v345 = vlaneseq
    %v346 = vshrl.u32 %v345, 7
    %v347 = vsub.s32 0, %v346
    %v348 = vrot.slane %v343, %v347
    %v349 = vlaneseq
    %v350 = vshrl.u32 %v349, 7
    %v351 = vsub.s32 1, %v350
    %v352 = vrot.slane %v343, %v351
    %v353 = vlaneseq
    %v354 = vshrl.u32 %v353, 7
    %v355 = vsub.s32 2, %v354
    %v356 = vrot.slane %v343, %v355
    %v357 = vlaneseq
    %v358 = vshrl.u32 %v357, 7
    %v359 = vsub.s32 3, %v358
    %v360 = vrot.slane %v343, %v359
    %v361 = vlaneseq
    %v362 = vshrl.u32 %v361, 7
    %v363 = vsub.s32 4, %v362
    %v364 = vrot.slane %v343, %v363
    %v365 = vlaneseq
    %v366 = vshrl.u32 %v365, 7
    %v367 = vsub.s32 5, %v366
    %v368 = vrot.slane %v343, %v367
    %v378 = vunpack.c.l.b16 %v52
    %v379 = vunpack.c.h.b16 %v52
    %v380 = vunpack.c.l.b16 %v53
    %v381 = vunpack.c.h.b16 %v53
    %v382 = vunpack.c.l.b16 %v54
    %v383 = vunpack.c.h.b16 %v54
    %v384 = vpack.c.b16 %v378, %v378
    %v385 = vpack.c.b16 %v379, %v379
    %v386 = vpack.c.b16 %v380, %v380
    %v387 = vpack.c.b16 %v381, %v381
    %v388 = vpack.c.b16 %v382, %v382
    %v389 = vpack.c.b16 %v383, %v383
    %v684 = vunpack.c.l.b16 %v55
    %v685 = vunpack.c.h.b16 %v55
    %v686 = vunpack.c.l.b16 %v56
    %v687 = vunpack.c.h.b16 %v56
    %v688 = vunpack.c.l.b16 %v57
    %v689 = vunpack.c.h.b16 %v57
    %v690 = vunpack.c.l.b16 %v58
    %v691 = vunpack.c.h.b16 %v58
    %v692 = vunpack.c.l.b16 %v59
    %v693 = vunpack.c.h.b16 %v59
    %v694 = vunpack.c.l.b16 %v60
    %v695 = vunpack.c.h.b16 %v60
    %v696 = vunpack.c.l.b16 %v61
    %v697 = vunpack.c.h.b16 %v61
    %v698 = vunpack.c.l.b16 %v62
    %v699 = vunpack.c.h.b16 %v62
    %v700 = vunpack.c.l.b16 %v63
    %v701 = vunpack.c.h.b16 %v63
    %v702 = vunpack.c.l.b16 %v64
    %v703 = vunpack.c.h.b16 %v64
    %v704 = vunpack.c.l.b16 %v65
    %v705 = vunpack.c.h.b16 %v65
    %v706 = vunpack.c.l.b16 %v66
    %v707 = vunpack.c.h.b16 %v66
    %v708 = vunpack.c.l.b16 %v67
    %v709 = vunpack.c.h.b16 %v67
    %v710 = vunpack.c.l.b16 %v68
    %v711 = vunpack.c.h.b16 %v68
    %v712 = vunpack.c.l.b16 %v69
    %v713 = vunpack.c.h.b16 %v69
    %v714 = vunpack.c.l.b16 %v70
    %v715 = vunpack.c.h.b16 %v70
    %v716 = vunpack.c.l.b16 %v71
    %v717 = vunpack.c.h.b16 %v71
    %v718 = vunpack.c.l.b16 %v72
    %v719 = vunpack.c.h.b16 %v72
    %v720 = vunpack.c.l.b16 %v73
    %v721 = vunpack.c.h.b16 %v73
    %v722 = vunpack.c.l.b16 %v74
    %v723 = vunpack.c.h.b16 %v74
    %v724 = vunpack.c.l.b16 %v75
    %v725 = vunpack.c.h.b16 %v75
    %v726 = vunpack.c.l.b16 %v76
    %v727 = vunpack.c.h.b16 %v76
    %v728 = vunpack.c.l.b16 %v77
    %v729 = vunpack.c.h.b16 %v77
    %v730 = vunpack.c.l.b16 %v78
    %v731 = vunpack.c.h.b16 %v78
    %v732 = vunpack.c.l.b16 %v79
    %v733 = vunpack.c.h.b16 %v79
    %v734 = vunpack.c.l.b16 %v80
    %v735 = vunpack.c.h.b16 %v80
    %v736 = vunpack.c.l.b16 %v81
    %v737 = vunpack.c.h.b16 %v81
    %v738 = vunpack.c.l.b16 %v82
    %v739 = vunpack.c.h.b16 %v82
    %v740 = vunpack.c.l.b16 %v83
    %v741 = vunpack.c.h.b16 %v83
    %v742 = vunpack.c.l.b16 %v84
    %v743 = vunpack.c.h.b16 %v84
    %v744 = vunpack.c.l.b16 %v85
    %v745 = vunpack.c.h.b16 %v85
    %v746 = vunpack.c.l.b16 %v86
    %v747 = vunpack.c.h.b16 %v86
    %v748 = vunpack.c.l.b16 %v87
    %v749 = vunpack.c.h.b16 %v87
    %v750 = vunpack.c.l.b16 %v88
    %v751 = vunpack.c.h.b16 %v88
    %v752 = vunpack.c.l.b16 %v89
    %v753 = vunpack.c.h.b16 %v89
    %v754 = vunpack.c.l.b16 %v90
    %v755 = vunpack.c.h.b16 %v90
    %v756 = vunpack.c.l.b16 %v91
    %v757 = vunpack.c.h.b16 %v91
    %v758 = vunpack.c.l.b16 %v92
    %v759 = vunpack.c.h.b16 %v92
    %v760 = vunpack.c.l.b16 %v93
    %v761 = vunpack.c.h.b16 %v93
    %v762 = vunpack.c.l.b16 %v94
    %v763 = vunpack.c.h.b16 %v94
    %v764 = vunpack.c.l.b16 %v95
    %v765 = vunpack.c.h.b16 %v95
    %v766 = vunpack.c.l.b16 %v96
    %v767 = vunpack.c.h.b16 %v96
    %v768 = vunpack.c.l.b16 %v97
    %v769 = vunpack.c.h.b16 %v97
    %v770 = vunpack.c.l.b16 %v98
    %v771 = vunpack.c.h.b16 %v98
    %v772 = vunpack.c.l.b16 %v99
    %v773 = vunpack.c.h.b16 %v99
    %v774 = vunpack.c.l.b16 %v100
    %v775 = vunpack.c.h.b16 %v100
    %v776 = vunpack.c.l.b16 %v101
    %v777 = vunpack.c.h.b16 %v101
    %v778 = vunpack.c.l.b16 %v102
    %v779 = vunpack.c.h.b16 %v102
    %v780 = vunpack.c.l.b16 %v103
    %v781 = vunpack.c.h.b16 %v103
    %v782 = vunpack.c.l.b16 %v104
    %v783 = vunpack.c.h.b16 %v104
    %v784 = vunpack.c.l.b16 %v105
    %v785 = vunpack.c.h.b16 %v105
    %v786 = vunpack.c.l.b16 %v106
    %v787 = vunpack.c.h.b16 %v106
    %v788 = vunpack.c.l.b16 %v107
    %v789 = vunpack.c.h.b16 %v107
    %v790 = vunpack.c.l.b16 %v108
    %v791 = vunpack.c.h.b16 %v108
    %v792 = vunpack.c.l.b16 %v109
    %v793 = vunpack.c.h.b16 %v109
    %v794 = vunpack.c.l.b16 %v110
    %v795 = vunpack.c.h.b16 %v110
    %v796 = vunpack.c.l.b16 %v111
    %v797 = vunpack.c.h.b16 %v111
    %v798 = vunpack.c.l.b16 %v112
    %v799 = vunpack.c.h.b16 %v112
    %v800 = vunpack.c.l.b16 %v113
    %v801 = vunpack.c.h.b16 %v113
    %v802 = vunpack.c.l.b16 %v114
    %v803 = vunpack.c.h.b16 %v114
    %v804 = vunpack.c.l.b16 %v115
    %v805 = vunpack.c.h.b16 %v115
    %v806 = vunpack.c.l.b16 %v116
    %v807 = vunpack.c.h.b16 %v116
    %v808 = vunpack.c.l.b16 %v117
    %v809 = vunpack.c.h.b16 %v117
    %v810 = vunpack.c.l.b16 %v118
    %v811 = vunpack.c.h.b16 %v118
    %v812 = vunpack.c.l.b16 %v119
    %v813 = vunpack.c.h.b16 %v119
    %v814 = vunpack.c.l.b16 %v120
    %v815 = vunpack.c.h.b16 %v120
    %v816 = vunpack.c.l.b16 %v121
    %v817 = vunpack.c.h.b16 %v121
    %v818 = vunpack.c.l.b16 %v122
    %v819 = vunpack.c.h.b16 %v122
    %v820 = vunpack.c.l.b16 %v123
    %v821 = vunpack.c.h.b16 %v123
    %v822 = vunpack.c.l.b16 %v124
    %v823 = vunpack.c.h.b16 %v124
    %v824 = vunpack.c.l.b16 %v125
    %v825 = vunpack.c.h.b16 %v125
    %v826 = vunpack.c.l.b16 %v126
    %v827 = vunpack.c.h.b16 %v126
    %v828 = vunpack.c.l.b16 %v127
    %v829 = vunpack.c.h.b16 %v127
    %v830 = vunpack.c.l.b16 %v128
    %v831 = vunpack.c.h.b16 %v128
    %v832 = vunpack.c.l.b16 %v129
    %v833 = vunpack.c.h.b16 %v129
    %v834 = vunpack.c.l.b16 %v130
    %v835 = vunpack.c.h.b16 %v130
    %v836 = vunpack.c.l.b16 %v131
    %v837 = vunpack.c.h.b16 %v131
    %v838 = vunpack.c.l.b16 %v132
    %v839 = vunpack.c.h.b16 %v132
    %v840 = vunpack.c.l.b16 %v133
    %v841 = vunpack.c.h.b16 %v133
    %v842 = vunpack.c.l.b16 %v134
    %v843 = vunpack.c.h.b16 %v134
    %v844 = vunpack.c.l.b16 %v135
    %v845 = vunpack.c.h.b16 %v135
    %v846 = vunpack.c.l.b16 %v136
    %v847 = vunpack.c.h.b16 %v136
    %v848 = vunpack.c.l.b16 %v137
    %v849 = vunpack.c.h.b16 %v137
    %v850 = vunpack.c.l.b16 %v138
    %v851 = vunpack.c.h.b16 %v138
    %v852 = vunpack.c.l.b16 %v139
    %v853 = vunpack.c.h.b16 %v139
    %v854 = vunpack.c.l.b16 %v140
    %v855 = vunpack.c.h.b16 %v140
    %v856 = vunpack.c.l.b16 %v141
    %v857 = vunpack.c.h.b16 %v141
    %v858 = vunpack.c.l.b16 %v142
    %v859 = vunpack.c.h.b16 %v142
    %v860 = vunpack.c.l.b16 %v143
    %v861 = vunpack.c.h.b16 %v143
    %v862 = vunpack.c.l.b16 %v144
    %v863 = vunpack.c.h.b16 %v144
    %v864 = vunpack.c.l.b16 %v145
    %v865 = vunpack.c.h.b16 %v145
    %v866 = vunpack.c.l.b16 %v146
    %v867 = vunpack.c.h.b16 %v146
    %v868 = vunpack.c.l.b16 %v147
    %v869 = vunpack.c.h.b16 %v147
    %v870 = vunpack.c.l.b16 %v148
    %v871 = vunpack.c.h.b16 %v148
    %v872 = vunpack.c.l.b16 %v149
    %v873 = vunpack.c.h.b16 %v149
    %v874 = vunpack.c.l.b16 %v150
    %v875 = vunpack.c.h.b16 %v150
    %v876 = vunpack.c.l.b16 %v151
    %v877 = vunpack.c.h.b16 %v151
    %v878 = vunpack.c.l.b16 %v152
    %v879 = vunpack.c.h.b16 %v152
    %v880 = vunpack.c.l.b16 %v153
    %v881 = vunpack.c.h.b16 %v153
    %v882 = vunpack.c.l.b16 %v154
    %v883 = vunpack.c.h.b16 %v154
    %v884 = vunpack.c.l.b16 %v155
    %v885 = vunpack.c.h.b16 %v155
    %v886 = vunpack.c.l.b16 %v156
    %v887 = vunpack.c.h.b16 %v156
    %v888 = vunpack.c.l.b16 %v157
    %v889 = vunpack.c.h.b16 %v157
    %v890 = vunpack.c.l.b16 %v158
    %v891 = vunpack.c.h.b16 %v158
    %v892 = vunpack.c.l.b16 %v159
    %v893 = vunpack.c.h.b16 %v159
    %v894 = vunpack.c.l.b16 %v160
    %v895 = vunpack.c.h.b16 %v160
    %v896 = vunpack.c.l.b16 %v161
    %v897 = vunpack.c.h.b16 %v161
    %v898 = vunpack.c.l.b16 %v162
    %v899 = vunpack.c.h.b16 %v162
    %v900 = vunpack.c.l.b16 %v163
    %v901 = vunpack.c.h.b16 %v163
    %v902 = vunpack.c.l.b16 %v164
    %v903 = vunpack.c.h.b16 %v164
    %v904 = vunpack.c.l.b16 %v165
    %v905 = vunpack.c.h.b16 %v165
    %v906 = vunpack.c.l.b16 %v166
    %v907 = vunpack.c.h.b16 %v166
    %v908 = vunpack.c.l.b16 %v167
    %v909 = vunpack.c.h.b16 %v167
    %v910 = vunpack.c.l.b16 %v168
    %v911 = vunpack.c.h.b16 %v168
    %v912 = vunpack.c.l.b16 %v169
    %v913 = vunpack.c.h.b16 %v169
    %v914 = vunpack.c.l.b16 %v170
    %v915 = vunpack.c.h.b16 %v170
    %v916 = vunpack.c.l.b16 %v171
    %v917 = vunpack.c.h.b16 %v171
    %v918 = vunpack.c.l.b16 %v172
    %v919 = vunpack.c.h.b16 %v172
    %v920 = vunpack.c.l.b16 %v173
    %v921 = vunpack.c.h.b16 %v173
    %v922 = vunpack.c.l.b16 %v174
    %v923 = vunpack.c.h.b16 %v174
    %v924 = vunpack.c.l.b16 %v175
    %v925 = vunpack.c.h.b16 %v175
    %v926 = vunpack.c.l.b16 %v176
    %v927 = vunpack.c.h.b16 %v176
    %v928 = vunpack.c.l.b16 %v177
    %v929 = vunpack.c.h.b16 %v177
    %v930 = vunpack.c.l.b16 %v178
    %v931 = vunpack.c.h.b16 %v178
    %v932 = vunpack.c.l.b16 %v179
    %v933 = vunpack.c.h.b16 %v179
    %v934 = vunpack.c.l.b16 %v180
    %v935 = vunpack.c.h.b16 %v180
    %v936 = vunpack.c.l.b16 %v181
    %v937 = vunpack.c.h.b16 %v181
    %v938 = vunpack.c.l.b16 %v182
    %v939 = vunpack.c.h.b16 %v182
    %v940 = vunpack.c.l.b16 %v183
    %v941 = vunpack.c.h.b16 %v183
    %v942 = vunpack.c.l.b16 %v184
    %v943 = vunpack.c.h.b16 %v184
    %v944 = vunpack.c.l.b16 %v185
    %v945 = vunpack.c.h.b16 %v185
    %v946 = vunpack.c.l.b16 %v186
    %v947 = vunpack.c.h.b16 %v186
    %v948 = vunpack.c.l.b16 %v187
    %v949 = vunpack.c.h.b16 %v187
    %v950 = vunpack.c.l.b16 %v188
    %v951 = vunpack.c.h.b16 %v188
    %v952 = vunpack.c.l.b16 %v189
    %v953 = vunpack.c.h.b16 %v189
    %v954 = vunpack.c.l.b16 %v190
    %v955 = vunpack.c.h.b16 %v190
    %v956 = vunpack.c.l.b16 %v191
    %v957 = vunpack.c.h.b16 %v191
    %v958 = vunpack.c.l.b16 %v192
    %v959 = vunpack.c.h.b16 %v192
    %v960 = vunpack.c.l.b16 %v193
    %v961 = vunpack.c.h.b16 %v193
    %v962 = vunpack.c.l.b16 %v194
    %v963 = vunpack.c.h.b16 %v194
    %v964 = vunpack.c.l.b16 %v195
    %v965 = vunpack.c.h.b16 %v195
    %v966 = vunpack.c.l.b16 %v196
    %v967 = vunpack.c.h.b16 %v196
    %v968 = vunpack.c.l.b16 %v197
    %v969 = vunpack.c.h.b16 %v197
    %v970 = vunpack.c.l.b16 %v198
    %v971 = vunpack.c.h.b16 %v198
    %v972 = vunpack.c.l.b16 %v199
    %v973 = vunpack.c.h.b16 %v199
    %v974 = vunpack.c.l.b16 %v200
    %v975 = vunpack.c.h.b16 %v200
    %v976 = vunpack.c.l.b16 %v201
    %v977 = vunpack.c.h.b16 %v201
    %v978 = vunpack.c.l.b16 %v202
    %v979 = vunpack.c.h.b16 %v202
    %v980 = vunpack.c.l.b16 %v203
    %v981 = vunpack.c.h.b16 %v203
    %v982 = vunpack.c.l.b16 %v204
    %v983 = vunpack.c.h.b16 %v204
    %v984 = vunpack.c.l.b16 %v205
    %v985 = vunpack.c.h.b16 %v205
    %v986 = vunpack.c.l.b16 %v206
    %v987 = vunpack.c.h.b16 %v206
    %v988 = vunpack.c.l.b16 %v207
    %v989 = vunpack.c.h.b16 %v207
    %v990 = vunpack.c.l.b16 %v208
    %v991 = vunpack.c.h.b16 %v208
    %v992 = vunpack.c.l.b16 %v209
    %v993 = vunpack.c.h.b16 %v209
    %v994 = vunpack.c.l.b16 %v210
    %v995 = vunpack.c.h.b16 %v210
    %v996 = vunpack.c.l.b16 %v211
    %v997 = vunpack.c.h.b16 %v211
    %v998 = vunpack.c.l.b16 %v212
    %v999 = vunpack.c.h.b16 %v212
    %v1000 = vunpack.c.l.b16 %v213
    %v1001 = vunpack.c.h.b16 %v213
    %v1002 = vunpack.c.l.b16 %v214
    %v1003 = vunpack.c.h.b16 %v214
    %v1004 = vunpack.c.l.b16 %v215
    %v1005 = vunpack.c.h.b16 %v215
    %v1006 = vunpack.c.l.b16 %v216
    %v1007 = vunpack.c.h.b16 %v216
    %v1008 = vunpack.c.l.b16 %v217
    %v1009 = vunpack.c.h.b16 %v217
    %v1010 = vunpack.c.l.b16 %v218
    %v1011 = vunpack.c.h.b16 %v218
    %v1012 = vunpack.c.l.b16 %v219
    %v1013 = vunpack.c.h.b16 %v219
    %v1014 = vunpack.c.l.b16 %v220
    %v1015 = vunpack.c.h.b16 %v220
    %v1016 = vunpack.c.l.b16 %v221
    %v1017 = vunpack.c.h.b16 %v221
    %v1018 = vunpack.c.l.b16 %v222
    %v1019 = vunpack.c.h.b16 %v222
    %v1020 = vunpack.c.l.b16 %v223
    %v1021 = vunpack.c.h.b16 %v223
    %v1022 = vunpack.c.l.b16 %v224
    %v1023 = vunpack.c.h.b16 %v224
    %v1024 = vunpack.c.l.b16 %v225
    %v1025 = vunpack.c.h.b16 %v225
    %v1026 = vunpack.c.l.b16 %v226
    %v1027 = vunpack.c.h.b16 %v226
    %v1028 = vunpack.c.l.b16 %v227
    %v1029 = vunpack.c.h.b16 %v227
    %v1030 = vunpack.c.l.b16 %v228
    %v1031 = vunpack.c.h.b16 %v228
    %v1032 = vunpack.c.l.b16 %v229
    %v1033 = vunpack.c.h.b16 %v229
    %v1034 = vunpack.c.l.b16 %v230
    %v1035 = vunpack.c.h.b16 %v230
    %v1036 = vunpack.c.l.b16 %v231
    %v1037 = vunpack.c.h.b16 %v231
    %v1038 = vunpack.c.l.b16 %v232
    %v1039 = vunpack.c.h.b16 %v232
    %v1040 = vunpack.c.l.b16 %v233
    %v1041 = vunpack.c.h.b16 %v233
    %v1042 = vunpack.c.l.b16 %v234
    %v1043 = vunpack.c.h.b16 %v234
    %v1044 = vunpack.c.l.b16 %v235
    %v1045 = vunpack.c.h.b16 %v235
    %v1046 = vunpack.c.l.b16 %v236
    %v1047 = vunpack.c.h.b16 %v236
    %v1048 = vunpack.c.l.b16 %v237
    %v1049 = vunpack.c.h.b16 %v237
    %v1050 = vunpack.c.l.b16 %v238
    %v1051 = vunpack.c.h.b16 %v238
    %v1052 = vunpack.c.l.b16 %v239
    %v1053 = vunpack.c.h.b16 %v239
    %v1054 = vunpack.c.l.b16 %v240
    %v1055 = vunpack.c.h.b16 %v240
    %v1056 = vunpack.c.l.b16 %v241
    %v1057 = vunpack.c.h.b16 %v241
    %v1058 = vunpack.c.l.b16 %v242
    %v1059 = vunpack.c.h.b16 %v242
    %v1060 = vunpack.c.l.b16 %v243
    %v1061 = vunpack.c.h.b16 %v243
    %v1062 = vunpack.c.l.b16 %v244
    %v1063 = vunpack.c.h.b16 %v244
    %v1064 = vunpack.c.l.b16 %v245
    %v1065 = vunpack.c.h.b16 %v245
    %v1066 = vunpack.c.l.b16 %v246
    %v1067 = vunpack.c.h.b16 %v246
    %v1068 = vunpack.c.l.b16 %v247
    %v1069 = vunpack.c.h.b16 %v247
    %v1070 = vunpack.c.l.b16 %v248
    %v1071 = vunpack.c.h.b16 %v248
    %v1072 = vunpack.c.l.b16 %v249
    %v1073 = vunpack.c.h.b16 %v249
    %v1074 = vunpack.c.l.b16 %v250
    %v1075 = vunpack.c.h.b16 %v250
    %v1076 = vunpack.c.l.b16 %v251
    %v1077 = vunpack.c.h.b16 %v251
    %v1078 = vunpack.c.l.b16 %v252
    %v1079 = vunpack.c.h.b16 %v252
    %v1080 = vunpack.c.l.b16 %v253
    %v1081 = vunpack.c.h.b16 %v253
    %v1082 = vunpack.c.l.b16 %v254
    %v1083 = vunpack.c.h.b16 %v254
    %v1084 = vunpack.c.l.b16 %v255
    %v1085 = vunpack.c.h.b16 %v255
    %v1086 = vunpack.c.l.b16 %v256
    %v1087 = vunpack.c.h.b16 %v256
    %v1088 = vunpack.c.l.b16 %v257
    %v1089 = vunpack.c.h.b16 %v257
    %v1090 = vunpack.c.l.b16 %v258
    %v1091 = vunpack.c.h.b16 %v258
    %v1092 = vunpack.c.l.b16 %v259
    %v1093 = vunpack.c.h.b16 %v259
    %v1094 = vunpack.c.l.b16 %v260
    %v1095 = vunpack.c.h.b16 %v260
    %v1096 = vunpack.c.l.b16 %v261
    %v1097 = vunpack.c.h.b16 %v261
    %v1098 = vunpack.c.l.b16 %v262
    %v1099 = vunpack.c.h.b16 %v262
    %v1100 = vunpack.c.l.b16 %v263
    %v1101 = vunpack.c.h.b16 %v263
    %v1102 = vunpack.c.l.b16 %v264
    %v1103 = vunpack.c.h.b16 %v264
    %v1104 = vunpack.c.l.b16 %v265
    %v1105 = vunpack.c.h.b16 %v265
    %v1106 = vunpack.c.l.b16 %v266
    %v1107 = vunpack.c.h.b16 %v266
    %v1108 = vunpack.c.l.b16 %v267
    %v1109 = vunpack.c.h.b16 %v267
    %v1110 = vunpack.c.l.b16 %v268
    %v1111 = vunpack.c.h.b16 %v268
    %v1112 = vunpack.c.l.b16 %v269
    %v1113 = vunpack.c.h.b16 %v269
    %v1114 = vunpack.c.l.b16 %v270
    %v1115 = vunpack.c.h.b16 %v270
    %v1116 = vunpack.c.l.b16 %v271
    %v1117 = vunpack.c.h.b16 %v271
    %v1118 = vunpack.c.l.b16 %v272
    %v1119 = vunpack.c.h.b16 %v272
    %v1120 = vunpack.c.l.b16 %v273
    %v1121 = vunpack.c.h.b16 %v273
    %v1122 = vunpack.c.l.b16 %v274
    %v1123 = vunpack.c.h.b16 %v274
    %v1124 = vunpack.c.l.b16 %v275
    %v1125 = vunpack.c.h.b16 %v275
    %v1126 = vunpack.c.l.b16 %v276
    %v1127 = vunpack.c.h.b16 %v276
    %v1128 = vunpack.c.l.b16 %v277
    %v1129 = vunpack.c.h.b16 %v277
    %v1130 = vunpack.c.l.b16 %v278
    %v1131 = vunpack.c.h.b16 %v278
    %v1132 = vunpack.c.l.b16 %v279
    %v1133 = vunpack.c.h.b16 %v279
    %v1134 = vunpack.c.l.b16 %v280
    %v1135 = vunpack.c.h.b16 %v280
    %v1136 = vunpack.c.l.b16 %v281
    %v1137 = vunpack.c.h.b16 %v281
    %v1138 = vunpack.c.l.b16 %v282
    %v1139 = vunpack.c.h.b16 %v282
    %v1140 = vunpack.c.l.b16 %v283
    %v1141 = vunpack.c.h.b16 %v283
    %v1142 = vunpack.c.l.b16 %v284
    %v1143 = vunpack.c.h.b16 %v284
    %v1144 = vunpack.c.l.b16 %v285
    %v1145 = vunpack.c.h.b16 %v285
    %v1146 = vunpack.c.l.b16 %v286
    %v1147 = vunpack.c.h.b16 %v286
    %v1148 = vunpack.c.l.b16 %v287
    %v1149 = vunpack.c.h.b16 %v287
    %v1150 = vunpack.c.l.b16 %v288
    %v1151 = vunpack.c.h.b16 %v288
    %v1152 = vunpack.c.l.b16 %v289
    %v1153 = vunpack.c.h.b16 %v289
    %v1154 = vunpack.c.l.b16 %v290
    %v1155 = vunpack.c.h.b16 %v290
    %v1156 = vunpack.c.l.b16 %v291
    %v1157 = vunpack.c.h.b16 %v291
    %v1158 = vunpack.c.l.b16 %v292
    %v1159 = vunpack.c.h.b16 %v292
    %v1160 = vunpack.c.l.b16 %v293
    %v1161 = vunpack.c.h.b16 %v293
    %v1162 = vunpack.c.l.b16 %v294
    %v1163 = vunpack.c.h.b16 %v294
    %v1164 = vunpack.c.l.b16 %v295
    %v1165 = vunpack.c.h.b16 %v295
    %v1166 = vunpack.c.l.b16 %v296
    %v1167 = vunpack.c.h.b16 %v296
    %v1168 = vunpack.c.l.b16 %v297
    %v1169 = vunpack.c.h.b16 %v297
    %v1170 = vunpack.c.l.b16 %v298
    %v1171 = vunpack.c.h.b16 %v298
    %v1172 = vunpack.c.l.b16 %v299
    %v1173 = vunpack.c.h.b16 %v299
    %v1174 = vunpack.c.l.b16 %v300
    %v1175 = vunpack.c.h.b16 %v300
    %v1176 = vunpack.c.l.b16 %v301
    %v1177 = vunpack.c.h.b16 %v301
    %v1178 = vunpack.c.l.b16 %v302
    %v1179 = vunpack.c.h.b16 %v302
    %v1180 = vunpack.c.l.b16 %v303
    %v1181 = vunpack.c.h.b16 %v303
    %v1182 = vunpack.c.l.b16 %v304
    %v1183 = vunpack.c.h.b16 %v304
    %v1184 = vunpack.c.l.b16 %v305
    %v1185 = vunpack.c.h.b16 %v305
    %v1186 = vunpack.c.l.b16 %v306
    %v1187 = vunpack.c.h.b16 %v306
    %v1188 = vunpack.c.l.b16 %v307
    %v1189 = vunpack.c.h.b16 %v307
    %v1190 = vunpack.c.l.b16 %v308
    %v1191 = vunpack.c.h.b16 %v308
    %v1192 = vunpack.c.l.b16 %v309
    %v1193 = vunpack.c.h.b16 %v309
    %v1194 = vunpack.c.l.b16 %v310
    %v1195 = vunpack.c.h.b16 %v310
    %v1196 = vunpack.c.l.b16 %v311
    %v1197 = vunpack.c.h.b16 %v311
    %v1198 = vunpack.c.l.b16 %v312
    %v1199 = vunpack.c.h.b16 %v312
    %v1200 = vunpack.c.l.b16 %v313
    %v1201 = vunpack.c.h.b16 %v313
    %v1202 = vunpack.c.l.b16 %v314
    %v1203 = vunpack.c.h.b16 %v314
    %v1204 = vunpack.c.l.b16 %v315
    %v1205 = vunpack.c.h.b16 %v315
    %v1206 = vunpack.c.l.b16 %v316
    %v1207 = vunpack.c.h.b16 %v316
    %v1208 = vunpack.c.l.b16 %v317
    %v1209 = vunpack.c.h.b16 %v317
    %v1210 = vunpack.c.l.b16 %v318
    %v1211 = vunpack.c.h.b16 %v318
    %v1212 = vunpack.c.l.b16 %v319
    %v1213 = vunpack.c.h.b16 %v319
    %v1214 = vunpack.c.l.b16 %v320
    %v1215 = vunpack.c.h.b16 %v320
    %v1216 = vunpack.c.l.b16 %v321
    %v1217 = vunpack.c.h.b16 %v321
    %v1218 = vunpack.c.l.b16 %v322
    %v1219 = vunpack.c.h.b16 %v322
    %v1220 = vunpack.c.l.b16 %v323
    %v1221 = vunpack.c.h.b16 %v323
    %v1222 = vunpack.c.l.b16 %v324
    %v1223 = vunpack.c.h.b16 %v324
    %v1224 = vunpack.c.l.b16 %v325
    %v1225 = vunpack.c.h.b16 %v325
    %v1226 = vunpack.c.l.b16 %v326
    %v1227 = vunpack.c.h.b16 %v326
    %v1228 = vunpack.c.l.b16 %v327
    %v1229 = vunpack.c.h.b16 %v327
    %v1230 = vunpack.c.l.b16 %v328
    %v1231 = vunpack.c.h.b16 %v328
    %v1232 = vunpack.c.l.b16 %v329
    %v1233 = vunpack.c.h.b16 %v329
    %v1234 = vunpack.c.l.b16 %v330
    %v1235 = vunpack.c.h.b16 %v330
    %v1236 = vunpack.c.l.b16 %v331
    %v1237 = vunpack.c.h.b16 %v331
    %v1238 = vunpack.c.l.b16 %v332
    %v1239 = vunpack.c.h.b16 %v332
    %v1240 = vunpack.c.l.b16 %v333
    %v1241 = vunpack.c.h.b16 %v333
    %v1242 = vunpack.c.l.b16 %v334
    %v1243 = vunpack.c.h.b16 %v334
    %v1244 = vunpack.c.l.b16 %v335
    %v1245 = vunpack.c.h.b16 %v335
    %v1246 = vunpack.c.l.b16 %v336
    %v1247 = vunpack.c.h.b16 %v336
    %v1248 = vunpack.c.l.b16 %v337
    %v1249 = vunpack.c.h.b16 %v337
    %v1250 = vunpack.c.l.b16 %v338
    %v1251 = vunpack.c.h.b16 %v338
    %v1252 = vunpack.c.l.b16 %v339
    %v1253 = vunpack.c.h.b16 %v339
    %v1254 = vunpack.c.l.b16 %v340
    %v1255 = vunpack.c.h.b16 %v340
    %v1256 = vunpack.c.l.b16 %v341
    %v1257 = vunpack.c.h.b16 %v341
    %v1258 = vunpack.c.l.b16 %v342
    %v1259 = vunpack.c.h.b16 %v342
    %v1260 = vpack.c.b16 %v690, %v684
    %v1261 = vpack.c.b16 %v691, %v685
    %v1262 = vpack.c.b16 %v692, %v686
    %v1263 = vpack.c.b16 %v693, %v687
    %v1264 = vpack.c.b16 %v694, %v688
    %v1265 = vpack.c.b16 %v695, %v689
    %v1266 = vpack.c.b16 %v702, %v696
    %v1267 = vpack.c.b16 %v703, %v697
    %v1268 = vpack.c.b16 %v704, %v698
    %v1269 = vpack.c.b16 %v705, %v699
    %v1270 = vpack.c.b16 %v706, %v700
    %v1271 = vpack.c.b16 %v707, %v701
    %v1272 = vpack.c.b16 %v714, %v708
    %v1273 = vpack.c.b16 %v715, %v709
    %v1274 = vpack.c.b16 %v716, %v710
    %v1275 = vpack.c.b16 %v717, %v711
    %v1276 = vpack.c.b16 %v718, %v712
    %v1277 = vpack.c.b16 %v719, %v713
    %v1278 = vpack.c.b16 %v726, %v720
    %v1279 = vpack.c.b16 %v727, %v721
    %v1280 = vpack.c.b16 %v728, %v722
    %v1281 = vpack.c.b16 %v729, %v723
    %v1282 = vpack.c.b16 %v730, %v724
    %v1283 = vpack.c.b16 %v731, %v725
    %v1284 = vpack.c.b16 %v738, %v732
    %v1285 = vpack.c.b16 %v739, %v733
    %v1286 = vpack.c.b16 %v740, %v734
    %v1287 = vpack.c.b16 %v741, %v735
    %v1288 = vpack.c.b16 %v742, %v736
    %v1289 = vpack.c.b16 %v743, %v737
    %v1290 = vpack.c.b16 %v750, %v744
    %v1291 = vpack.c.b16 %v751, %v745
    %v1292 = vpack.c.b16 %v752, %v746
    %v1293 = vpack.c.b16 %v753, %v747
    %v1294 = vpack.c.b16 %v754, %v748
    %v1295 = vpack.c.b16 %v755, %v749
    %v1296 = vpack.c.b16 %v762, %v756
    %v1297 = vpack.c.b16 %v763, %v757
    %v1298 = vpack.c.b16 %v764, %v758
    %v1299 = vpack.c.b16 %v765, %v759
    %v1300 = vpack.c.b16 %v766, %v760
    %v1301 = vpack.c.b16 %v767, %v761
    %v1302 = vpack.c.b16 %v774, %v768
    %v1303 = vpack.c.b16 %v775, %v769
    %v1304 = vpack.c.b16 %v776, %v770
    %v1305 = vpack.c.b16 %v777, %v771
    %v1306 = vpack.c.b16 %v778, %v772
    %v1307 = vpack.c.b16 %v779, %v773
    %v1308 = vpack.c.b16 %v786, %v780
    %v1309 = vpack.c.b16 %v787, %v781
    %v1310 = vpack.c.b16 %v788, %v782
    %v1311 = vpack.c.b16 %v789, %v783
    %v1312 = vpack.c.b16 %v790, %v784
    %v1313 = vpack.c.b16 %v791, %v785
    %v1314 = vpack.c.b16 %v798, %v792
    %v1315 = vpack.c.b16 %v799, %v793
    %v1316 = vpack.c.b16 %v800, %v794
    %v1317 = vpack.c.b16 %v801, %v795
    %v1318 = vpack.c.b16 %v802, %v796
    %v1319 = vpack.c.b16 %v803, %v797
    %v1320 = vpack.c.b16 %v810, %v804
    %v1321 = vpack.c.b16 %v811, %v805
    %v1322 = vpack.c.b16 %v812, %v806
    %v1323 = vpack.c.b16 %v813, %v807
    %v1324 = vpack.c.b16 %v814, %v808
    %v1325 = vpack.c.b16 %v815, %v809
    %v1326 = vpack.c.b16 %v822, %v816
    %v1327 = vpack.c.b16 %v823, %v817
    %v1328 = vpack.c.b16 %v824, %v818
    %v1329 = vpack.c.b16 %v825, %v819
    %v1330 = vpack.c.b16 %v826, %v820
    %v1331 = vpack.c.b16 %v827, %v821
    %v1332 = vpack.c.b16 %v834, %v828
    %v1333 = vpack.c.b16 %v835, %v829
    %v1334 = vpack.c.b16 %v836, %v830
    %v1335 = vpack.c.b16 %v837, %v831
    %v1336 = vpack.c.b16 %v838, %v832
    %v1337 = vpack.c.b16 %v839, %v833
    %v1338 = vpack.c.b16 %v846, %v840
    %v1339 = vpack.c.b16 %v847, %v841
    %v1340 = vpack.c.b16 %v848, %v842
    %v1341 = vpack.c.b16 %v849, %v843
    %v1342 = vpack.c.b16 %v850, %v844
    %v1343 = vpack.c.b16 %v851, %v845
    %v1344 = vpack.c.b16 %v858, %v852
    %v1345 = vpack.c.b16 %v859, %v853
    %v1346 = vpack.c.b16 %v860, %v854
    %v1347 = vpack.c.b16 %v861, %v855
    %v1348 = vpack.c.b16 %v862, %v856
    %v1349 = vpack.c.b16 %v863, %v857
    %v1350 = vpack.c.b16 %v870, %v864
    %v1351 = vpack.c.b16 %v871, %v865
    %v1352 = vpack.c.b16 %v872, %v866
    %v1353 = vpack.c.b16 %v873, %v867
    %v1354 = vpack.c.b16 %v874, %v868
    %v1355 = vpack.c.b16 %v875, %v869
    %v1356 = vpack.c.b16 %v882, %v876
    %v1357 = vpack.c.b16 %v883, %v877
    %v1358 = vpack.c.b16 %v884, %v878
    %v1359 = vpack.c.b16 %v885, %v879
    %v1360 = vpack.c.b16 %v886, %v880
    %v1361 = vpack.c.b16 %v887, %v881
    %v1362 = vpack.c.b16 %v894, %v888
    %v1363 = vpack.c.b16 %v895, %v889
    %v1364 = vpack.c.b16 %v896, %v890
    %v1365 = vpack.c.b16 %v897, %v891
    %v1366 = vpack.c.b16 %v898, %v892
    %v1367 = vpack.c.b16 %v899, %v893
    %v1368 = vpack.c.b16 %v906, %v900
    %v1369 = vpack.c.b16 %v907, %v901
    %v1370 = vpack.c.b16 %v908, %v902
    %v1371 = vpack.c.b16 %v909, %v903
    %v1372 = vpack.c.b16 %v910, %v904
    %v1373 = vpack.c.b16 %v911, %v905
    %v1374 = vpack.c.b16 %v918, %v912
    %v1375 = vpack.c.b16 %v919, %v913
    %v1376 = vpack.c.b16 %v920, %v914
    %v1377 = vpack.c.b16 %v921, %v915
    %v1378 = vpack.c.b16 %v922, %v916
    %v1379 = vpack.c.b16 %v923, %v917
    %v1380 = vpack.c.b16 %v930, %v924
    %v1381 = vpack.c.b16 %v931, %v925
    %v1382 = vpack.c.b16 %v932, %v926
    %v1383 = vpack.c.b16 %v933, %v927
    %v1384 = vpack.c.b16 %v934, %v928
    %v1385 = vpack.c.b16 %v935, %v929
    %v1386 = vpack.c.b16 %v942, %v936
    %v1387 = vpack.c.b16 %v943, %v937
    %v1388 = vpack.c.b16 %v944, %v938
    %v1389 = vpack.c.b16 %v945, %v939
    %v1390 = vpack.c.b16 %v946, %v940
    %v1391 = vpack.c.b16 %v947, %v941
    %v1392 = vpack.c.b16 %v954, %v948
    %v1393 = vpack.c.b16 %v955, %v949
    %v1394 = vpack.c.b16 %v956, %v950
    %v1395 = vpack.c.b16 %v957, %v951
    %v1396 = vpack.c.b16 %v958, %v952
    %v1397 = vpack.c.b16 %v959, %v953
    %v1398 = vpack.c.b16 %v966, %v960
    %v1399 = vpack.c.b16 %v967, %v961
    %v1400 = vpack.c.b16 %v968, %v962
    %v1401 = vpack.c.b16 %v969, %v963
    %v1402 = vpack.c.b16 %v970, %v964
    %v1403 = vpack.c.b16 %v971, %v965
    %v1404 = vpack.c.b16 %v978, %v972
    %v1405 = vpack.c.b16 %v979, %v973
    %v1406 = vpack.c.b16 %v980, %v974
    %v1407 = vpack.c.b16 %v981, %v975
    %v1408 = vpack.c.b16 %v982, %v976
    %v1409 = vpack.c.b16 %v983, %v977
    %v1410 = vpack.c.b16 %v990, %v984
    %v1411 = vpack.c.b16 %v991, %v985
    %v1412 = vpack.c.b16 %v992, %v986
    %v1413 = vpack.c.b16 %v993, %v987
    %v1414 = vpack.c.b16 %v994, %v988
    %v1415 = vpack.c.b16 %v995, %v989
    %v1416 = vpack.c.b16 %v1002, %v996
    %v1417 = vpack.c.b16 %v1003, %v997
    %v1418 = vpack.c.b16 %v1004, %v998
    %v1419 = vpack.c.b16 %v1005, %v999
    %v1420 = vpack.c.b16 %v1006, %v1000
    %v1421 = vpack.c.b16 %v1007, %v1001
    %v1422 = vpack.c.b16 %v1014, %v1008
    %v1423 = vpack.c.b16 %v1015, %v1009
    %v1424 = vpack.c.b16 %v1016, %v1010
    %v1425 = vpack.c.b16 %v1017, %v1011
    %v1426 = vpack.c.b16 %v1018, %v1012
    %v1427 = vpack.c.b16 %v1019, %v1013
    %v1428 = vpack.c.b16 %v1026, %v1020
    %v1429 = vpack.c.b16 %v1027, %v1021
    %v1430 = vpack.c.b16 %v1028, %v1022
    %v1431 = vpack.c.b16 %v1029, %v1023
    %v1432 = vpack.c.b16 %v1030, %v1024
    %v1433 = vpack.c.b16 %v1031, %v1025
    %v1434 = vpack.c.b16 %v1038, %v1032
    %v1435 = vpack.c.b16 %v1039, %v1033
    %v1436 = vpack.c.b16 %v1040, %v1034
    %v1437 = vpack.c.b16 %v1041, %v1035
    %v1438 = vpack.c.b16 %v1042, %v1036
    %v1439 = vpack.c.b16 %v1043, %v1037
    %v1440 = vpack.c.b16 %v1050, %v1044
    %v1441 = vpack.c.b16 %v1051, %v1045
    %v1442 = vpack.c.b16 %v1052, %v1046
    %v1443 = vpack.c.b16 %v1053, %v1047
    %v1444 = vpack.c.b16 %v1054, %v1048
    %v1445 = vpack.c.b16 %v1055, %v1049
    %v1446 = vpack.c.b16 %v1062, %v1056
    %v1447 = vpack.c.b16 %v1063, %v1057
    %v1448 = vpack.c.b16 %v1064, %v1058
    %v1449 = vpack.c.b16 %v1065, %v1059
    %v1450 = vpack.c.b16 %v1066, %v1060
    %v1451 = vpack.c.b16 %v1067, %v1061
    %v1452 = vpack.c.b16 %v1074, %v1068
    %v1453 = vpack.c.b16 %v1075, %v1069
    %v1454 = vpack.c.b16 %v1076, %v1070
    %v1455 = vpack.c.b16 %v1077, %v1071
    %v1456 = vpack.c.b16 %v1078, %v1072
    %v1457 = vpack.c.b16 %v1079, %v1073
    %v1458 = vpack.c.b16 %v1086, %v1080
    %v1459 = vpack.c.b16 %v1087, %v1081
    %v1460 = vpack.c.b16 %v1088, %v1082
    %v1461 = vpack.c.b16 %v1089, %v1083
    %v1462 = vpack.c.b16 %v1090, %v1084
    %v1463 = vpack.c.b16 %v1091, %v1085
    %v1464 = vpack.c.b16 %v1098, %v1092
    %v1465 = vpack.c.b16 %v1099, %v1093
    %v1466 = vpack.c.b16 %v1100, %v1094
    %v1467 = vpack.c.b16 %v1101, %v1095
    %v1468 = vpack.c.b16 %v1102, %v1096
    %v1469 = vpack.c.b16 %v1103, %v1097
    %v1470 = vpack.c.b16 %v1110, %v1104
    %v1471 = vpack.c.b16 %v1111, %v1105
    %v1472 = vpack.c.b16 %v1112, %v1106
    %v1473 = vpack.c.b16 %v1113, %v1107
    %v1474 = vpack.c.b16 %v1114, %v1108
    %v1475 = vpack.c.b16 %v1115, %v1109
    %v1476 = vpack.c.b16 %v1122, %v1116
    %v1477 = vpack.c.b16 %v1123, %v1117
    %v1478 = vpack.c.b16 %v1124, %v1118
    %v1479 = vpack.c.b16 %v1125, %v1119
    %v1480 = vpack.c.b16 %v1126, %v1120
    %v1481 = vpack.c.b16 %v1127, %v1121
    %v1482 = vpack.c.b16 %v1134, %v1128
    %v1483 = vpack.c.b16 %v1135, %v1129
    %v1484 = vpack.c.b16 %v1136, %v1130
    %v1485 = vpack.c.b16 %v1137, %v1131
    %v1486 = vpack.c.b16 %v1138, %v1132
    %v1487 = vpack.c.b16 %v1139, %v1133
    %v1488 = vpack.c.b16 %v1146, %v1140
    %v1489 = vpack.c.b16 %v1147, %v1141
    %v1490 = vpack.c.b16 %v1148, %v1142
    %v1491 = vpack.c.b16 %v1149, %v1143
    %v1492 = vpack.c.b16 %v1150, %v1144
    %v1493 = vpack.c.b16 %v1151, %v1145
    %v1494 = vpack.c.b16 %v1158, %v1152
    %v1495 = vpack.c.b16 %v1159, %v1153
    %v1496 = vpack.c.b16 %v1160, %v1154
    %v1497 = vpack.c.b16 %v1161, %v1155
    %v1498 = vpack.c.b16 %v1162, %v1156
    %v1499 = vpack.c.b16 %v1163, %v1157
    %v1500 = vpack.c.b16 %v1170, %v1164
    %v1501 = vpack.c.b16 %v1171, %v1165
    %v1502 = vpack.c.b16 %v1172, %v1166
    %v1503 = vpack.c.b16 %v1173, %v1167
    %v1504 = vpack.c.b16 %v1174, %v1168
    %v1505 = vpack.c.b16 %v1175, %v1169
    %v1506 = vpack.c.b16 %v1182, %v1176
    %v1507 = vpack.c.b16 %v1183, %v1177
    %v1508 = vpack.c.b16 %v1184, %v1178
    %v1509 = vpack.c.b16 %v1185, %v1179
    %v1510 = vpack.c.b16 %v1186, %v1180
    %v1511 = vpack.c.b16 %v1187, %v1181
    %v1512 = vpack.c.b16 %v1194, %v1188
    %v1513 = vpack.c.b16 %v1195, %v1189
    %v1514 = vpack.c.b16 %v1196, %v1190
    %v1515 = vpack.c.b16 %v1197, %v1191
    %v1516 = vpack.c.b16 %v1198, %v1192
    %v1517 = vpack.c.b16 %v1199, %v1193
    %v1518 = vpack.c.b16 %v1206, %v1200
    %v1519 = vpack.c.b16 %v1207, %v1201
    %v1520 = vpack.c.b16 %v1208, %v1202
    %v1521 = vpack.c.b16 %v1209, %v1203
    %v1522 = vpack.c.b16 %v1210, %v1204
    %v1523 = vpack.c.b16 %v1211, %v1205
    %v1524 = vpack.c.b16 %v1218, %v1212
    %v1525 = vpack.c.b16 %v1219, %v1213
    %v1526 = vpack.c.b16 %v1220, %v1214
    %v1527 = vpack.c.b16 %v1221, %v1215
    %v1528 = vpack.c.b16 %v1222, %v1216
    %v1529 = vpack.c.b16 %v1223, %v1217
    %v1530 = vpack.c.b16 %v1230, %v1224
    %v1531 = vpack.c.b16 %v1231, %v1225
    %v1532 = vpack.c.b16 %v1232, %v1226
    %v1533 = vpack.c.b16 %v1233, %v1227
    %v1534 = vpack.c.b16 %v1234, %v1228
    %v1535 = vpack.c.b16 %v1235, %v1229
    %v1536 = vpack.c.b16 %v1242, %v1236
    %v1537 = vpack.c.b16 %v1243, %v1237
    %v1538 = vpack.c.b16 %v1244, %v1238
    %v1539 = vpack.c.b16 %v1245, %v1239
    %v1540 = vpack.c.b16 %v1246, %v1240
    %v1541 = vpack.c.b16 %v1247, %v1241
    %v1542 = vpack.c.b16 %v1254, %v1248
    %v1543 = vpack.c.b16 %v1255, %v1249
    %v1544 = vpack.c.b16 %v1256, %v1250
    %v1545 = vpack.c.b16 %v1257, %v1251
    %v1546 = vpack.c.b16 %v1258, %v1252
    %v1547 = vpack.c.b16 %v1259, %v1253
    %1836 = vmatprep.subr.bf16.mxu0 %v1261
    %1837 = vmatpush1.bf16.msra.mxu0 %v1260
    %1838 = vmatprep.subr.bf16.mxu0 %v1267
    %1839 = vmatpush1.bf16.msra.mxu0 %v1266
    %1840 = vmatprep.subr.bf16.mxu0 %v1273
    %1841 = vmatpush1.bf16.msra.mxu0 %v1272
    %1842 = vmatprep.subr.bf16.mxu0 %v1279
    %1843 = vmatpush1.bf16.msra.mxu0 %v1278
    %1844 = vmatprep.subr.bf16.mxu0 %v1285
    %1845 = vmatpush1.bf16.msra.mxu0 %v1284
    %1846 = vmatprep.subr.bf16.mxu0 %v1291
    %1847 = vmatpush1.bf16.msra.mxu0 %v1290
    %1848 = vmatprep.subr.bf16.mxu0 %v1297
    %1849 = vmatpush1.bf16.msra.mxu0 %v1296
    %1850 = vmatprep.subr.bf16.mxu0 %v1303
    %1851 = vmatpush1.bf16.msra.mxu0 %v1302
    %1852 = vmatprep.subr.bf16.mxu0 %v1309
    %1853 = vmatpush1.bf16.msra.mxu0 %v1308
    %1854 = vmatprep.subr.bf16.mxu0 %v1315
    %1855 = vmatpush1.bf16.msra.mxu0 %v1314
    %1856 = vmatprep.subr.bf16.mxu0 %v1321
    %1857 = vmatpush1.bf16.msra.mxu0 %v1320
    %1858 = vmatprep.subr.bf16.mxu0 %v1327
    %1859 = vmatpush1.bf16.msra.mxu0 %v1326
    %1860 = vmatprep.subr.bf16.mxu0 %v1333
    %1861 = vmatpush1.bf16.msra.mxu0 %v1332
    %1862 = vmatprep.subr.bf16.mxu0 %v1339
    %1863 = vmatpush1.bf16.msra.mxu0 %v1338
    %1864 = vmatprep.subr.bf16.mxu0 %v1345
    %1865 = vmatpush1.bf16.msra.mxu0 %v1344
    %1866 = vmatprep.subr.bf16.mxu0 %v1351
    %1867 = vmatpush1.bf16.msra.mxu0 %v1350
    %1868 = vmatprep.mubr.bf16.mxu0 %v385
    %1869 = vmatmul.mubr.bf16.gmra.mrb[0].mxu0 %v384
    %v1870 = vpop.f32.mrb[0].mxu0
    %v1871 = vadd.f32 %v348, %v1870
    %v1872 = vpop.f32.mrb[0].mxu0
    %v1873 = vadd.f32 %v352, %v1872
    %v1874 = vpop.f32.mrb[0].mxu0
    %v1875 = vpop.f32.mrb[0].mxu0
    %1876 = vdwg.mxu0
    %1877 = vmatprep.subr.bf16.mxu0 %v1357
    %1878 = vmatpush1.bf16.msra.mxu0 %v1356
    %1879 = vmatprep.subr.bf16.mxu0 %v1363
    %1880 = vmatpush1.bf16.msra.mxu0 %v1362
    %1881 = vmatprep.subr.bf16.mxu0 %v1369
    %1882 = vmatpush1.bf16.msra.mxu0 %v1368
    %1883 = vmatprep.subr.bf16.mxu0 %v1375
    %1884 = vmatpush1.bf16.msra.mxu0 %v1374
    %1885 = vmatprep.subr.bf16.mxu0 %v1381
    %1886 = vmatpush1.bf16.msra.mxu0 %v1380
    %1887 = vmatprep.subr.bf16.mxu0 %v1387
    %1888 = vmatpush1.bf16.msra.mxu0 %v1386
    %1889 = vmatprep.subr.bf16.mxu0 %v1393
    %1890 = vmatpush1.bf16.msra.mxu0 %v1392
    %1891 = vmatprep.subr.bf16.mxu0 %v1399
    %1892 = vmatpush1.bf16.msra.mxu0 %v1398
    %1893 = vmatprep.subr.bf16.mxu0 %v1405
    %1894 = vmatpush1.bf16.msra.mxu0 %v1404
    %1895 = vmatprep.subr.bf16.mxu0 %v1411
    %1896 = vmatpush1.bf16.msra.mxu0 %v1410
    %1897 = vmatprep.subr.bf16.mxu0 %v1417
    %1898 = vmatpush1.bf16.msra.mxu0 %v1416
    %1899 = vmatprep.subr.bf16.mxu0 %v1423
    %1900 = vmatpush1.bf16.msra.mxu0 %v1422
    %1901 = vmatprep.subr.bf16.mxu0 %v1429
    %1902 = vmatpush1.bf16.msra.mxu0 %v1428
    %1903 = vmatprep.subr.bf16.mxu0 %v1435
    %1904 = vmatpush1.bf16.msra.mxu0 %v1434
    %1905 = vmatprep.subr.bf16.mxu0 %v1441
    %1906 = vmatpush1.bf16.msra.mxu0 %v1440
    %1907 = vmatprep.subr.bf16.mxu0 %v1447
    %1908 = vmatpush1.bf16.msra.mxu0 %v1446
    %1909 = vmatprep.mubr.bf16.mxu0 %v387
    %1910 = vmatmul.mubr.bf16.gmra.mrb[0].mxu0 %v386
    %v1911 = vpop.f32.mrb[0].mxu0
    %v1912 = vadd.f32 %v1871, %v1911
    %v1913 = vpop.f32.mrb[0].mxu0
    %v1914 = vadd.f32 %v1873, %v1913
    %v1915 = vpop.f32.mrb[0].mxu0
    %v1916 = vpop.f32.mrb[0].mxu0
    %1917 = vdwg.mxu0
    %1918 = vmatprep.subr.bf16.mxu0 %v1453
    %1919 = vmatpush1.bf16.msra.mxu0 %v1452
    %1920 = vmatprep.subr.bf16.mxu0 %v1459
    %1921 = vmatpush1.bf16.msra.mxu0 %v1458
    %1922 = vmatprep.subr.bf16.mxu0 %v1465
    %1923 = vmatpush1.bf16.msra.mxu0 %v1464
    %1924 = vmatprep.subr.bf16.mxu0 %v1471
    %1925 = vmatpush1.bf16.msra.mxu0 %v1470
    %1926 = vmatprep.subr.bf16.mxu0 %v1477
    %1927 = vmatpush1.bf16.msra.mxu0 %v1476
    %1928 = vmatprep.subr.bf16.mxu0 %v1483
    %1929 = vmatpush1.bf16.msra.mxu0 %v1482
    %1930 = vmatprep.subr.bf16.mxu0 %v1489
    %1931 = vmatpush1.bf16.msra.mxu0 %v1488
    %1932 = vmatprep.subr.bf16.mxu0 %v1495
    %1933 = vmatpush1.bf16.msra.mxu0 %v1494
    %1934 = vmatprep.subr.bf16.mxu0 %v1501
    %1935 = vmatpush1.bf16.msra.mxu0 %v1500
    %1936 = vmatprep.subr.bf16.mxu0 %v1507
    %1937 = vmatpush1.bf16.msra.mxu0 %v1506
    %1938 = vmatprep.subr.bf16.mxu0 %v1513
    %1939 = vmatpush1.bf16.msra.mxu0 %v1512
    %1940 = vmatprep.subr.bf16.mxu0 %v1519
    %1941 = vmatpush1.bf16.msra.mxu0 %v1518
    %1942 = vmatprep.subr.bf16.mxu0 %v1525
    %1943 = vmatpush1.bf16.msra.mxu0 %v1524
    %1944 = vmatprep.subr.bf16.mxu0 %v1531
    %1945 = vmatpush1.bf16.msra.mxu0 %v1530
    %1946 = vmatprep.subr.bf16.mxu0 %v1537
    %1947 = vmatpush1.bf16.msra.mxu0 %v1536
    %1948 = vmatprep.subr.bf16.mxu0 %v1543
    %1949 = vmatpush1.bf16.msra.mxu0 %v1542
    %1950 = vmatprep.mubr.bf16.mxu0 %v389
    %1951 = vmatmul.mubr.bf16.gmra.mrb[0].mxu0 %v388
    %v1952 = vpop.f32.mrb[0].mxu0
    %v1953 = vadd.f32 %v1912, %v1952
    %v1954 = vpop.f32.mrb[0].mxu0
    %v1955 = vadd.f32 %v1914, %v1954
    %v1956 = vpop.f32.mrb[0].mxu0
    %v1957 = vpop.f32.mrb[0].mxu0
    %1958 = vdwg.mxu0
    %1959 = vmatprep.subr.bf16.mxu0 %v1263
    %1960 = vmatpush1.bf16.msra.mxu0 %v1262
    %1961 = vmatprep.subr.bf16.mxu0 %v1269
    %1962 = vmatpush1.bf16.msra.mxu0 %v1268
    %1963 = vmatprep.subr.bf16.mxu0 %v1275
    %1964 = vmatpush1.bf16.msra.mxu0 %v1274
    %1965 = vmatprep.subr.bf16.mxu0 %v1281
    %1966 = vmatpush1.bf16.msra.mxu0 %v1280
    %1967 = vmatprep.subr.bf16.mxu0 %v1287
    %1968 = vmatpush1.bf16.msra.mxu0 %v1286
    %1969 = vmatprep.subr.bf16.mxu0 %v1293
    %1970 = vmatpush1.bf16.msra.mxu0 %v1292
    %1971 = vmatprep.subr.bf16.mxu0 %v1299
    %1972 = vmatpush1.bf16.msra.mxu0 %v1298
    %1973 = vmatprep.subr.bf16.mxu0 %v1305
    %1974 = vmatpush1.bf16.msra.mxu0 %v1304
    %1975 = vmatprep.subr.bf16.mxu0 %v1311
    %1976 = vmatpush1.bf16.msra.mxu0 %v1310
    %1977 = vmatprep.subr.bf16.mxu0 %v1317
    %1978 = vmatpush1.bf16.msra.mxu0 %v1316
    %1979 = vmatprep.subr.bf16.mxu0 %v1323
    %1980 = vmatpush1.bf16.msra.mxu0 %v1322
    %1981 = vmatprep.subr.bf16.mxu0 %v1329
    %1982 = vmatpush1.bf16.msra.mxu0 %v1328
    %1983 = vmatprep.subr.bf16.mxu0 %v1335
    %1984 = vmatpush1.bf16.msra.mxu0 %v1334
    %1985 = vmatprep.subr.bf16.mxu0 %v1341
    %1986 = vmatpush1.bf16.msra.mxu0 %v1340
    %1987 = vmatprep.subr.bf16.mxu0 %v1347
    %1988 = vmatpush1.bf16.msra.mxu0 %v1346
    %1989 = vmatprep.subr.bf16.mxu0 %v1353
    %1990 = vmatpush1.bf16.msra.mxu0 %v1352
    %1991 = vmatprep.mubr.bf16.mxu0 %v385
    %1992 = vmatmul.mubr.bf16.gmra.mrb[0].mxu0 %v384
    %v1993 = vpop.f32.mrb[0].mxu0
    %v1994 = vadd.f32 %v356, %v1993
    %v1995 = vpop.f32.mrb[0].mxu0
    %v1996 = vadd.f32 %v360, %v1995
    %v1997 = vpop.f32.mrb[0].mxu0
    %v1998 = vpop.f32.mrb[0].mxu0
    %1999 = vdwg.mxu0
    %2000 = vmatprep.subr.bf16.mxu0 %v1359
    %2001 = vmatpush1.bf16.msra.mxu0 %v1358
    %2002 = vmatprep.subr.bf16.mxu0 %v1365
    %2003 = vmatpush1.bf16.msra.mxu0 %v1364
    %2004 = vmatprep.subr.bf16.mxu0 %v1371
    %2005 = vmatpush1.bf16.msra.mxu0 %v1370
    %2006 = vmatprep.subr.bf16.mxu0 %v1377
    %2007 = vmatpush1.bf16.msra.mxu0 %v1376
    %2008 = vmatprep.subr.bf16.mxu0 %v1383
    %2009 = vmatpush1.bf16.msra.mxu0 %v1382
    %2010 = vmatprep.subr.bf16.mxu0 %v1389
    %2011 = vmatpush1.bf16.msra.mxu0 %v1388
    %2012 = vmatprep.subr.bf16.mxu0 %v1395
    %2013 = vmatpush1.bf16.msra.mxu0 %v1394
    %2014 = vmatprep.subr.bf16.mxu0 %v1401
    %2015 = vmatpush1.bf16.msra.mxu0 %v1400
    %2016 = vmatprep.subr.bf16.mxu0 %v1407
    %2017 = vmatpush1.bf16.msra.mxu0 %v1406
    %2018 = vmatprep.subr.bf16.mxu0 %v1413
    %2019 = vmatpush1.bf16.msra.mxu0 %v1412
    %2020 = vmatprep.subr.bf16.mxu0 %v1419
    %2021 = vmatpush1.bf16.msra.mxu0 %v1418
    %2022 = vmatprep.subr.bf16.mxu0 %v1425
    %2023 = vmatpush1.bf16.msra.mxu0 %v1424
    %2024 = vmatprep.subr.bf16.mxu0 %v1431
    %2025 = vmatpush1.bf16.msra.mxu0 %v1430
    %2026 = vmatprep.subr.bf16.mxu0 %v1437
    %2027 = vmatpush1.bf16.msra.mxu0 %v1436
    %2028 = vmatprep.subr.bf16.mxu0 %v1443
    %2029 = vmatpush1.bf16.msra.mxu0 %v1442
    %2030 = vmatprep.subr.bf16.mxu0 %v1449
    %2031 = vmatpush1.bf16.msra.mxu0 %v1448
    %2032 = vmatprep.mubr.bf16.mxu0 %v387
    %2033 = vmatmul.mubr.bf16.gmra.mrb[0].mxu0 %v386
    %v2034 = vpop.f32.mrb[0].mxu0
    %v2035 = vadd.f32 %v1994, %v2034
    %v2036 = vpop.f32.mrb[0].mxu0
    %v2037 = vadd.f32 %v1996, %v2036
    %v2038 = vpop.f32.mrb[0].mxu0
    %v2039 = vpop.f32.mrb[0].mxu0
    %2040 = vdwg.mxu0
    %2041 = vmatprep.subr.bf16.mxu0 %v1455
    %2042 = vmatpush1.bf16.msra.mxu0 %v1454
    %2043 = vmatprep.subr.bf16.mxu0 %v1461
    %2044 = vmatpush1.bf16.msra.mxu0 %v1460
    %2045 = vmatprep.subr.bf16.mxu0 %v1467
    %2046 = vmatpush1.bf16.msra.mxu0 %v1466
    %2047 = vmatprep.subr.bf16.mxu0 %v1473
    %2048 = vmatpush1.bf16.msra.mxu0 %v1472
    %2049 = vmatprep.subr.bf16.mxu0 %v1479
    %2050 = vmatpush1.bf16.msra.mxu0 %v1478
    %2051 = vmatprep.subr.bf16.mxu0 %v1485
    %2052 = vmatpush1.bf16.msra.mxu0 %v1484
    %2053 = vmatprep.subr.bf16.mxu0 %v1491
    %2054 = vmatpush1.bf16.msra.mxu0 %v1490
    %2055 = vmatprep.subr.bf16.mxu0 %v1497
    %2056 = vmatpush1.bf16.msra.mxu0 %v1496
    %2057 = vmatprep.subr.bf16.mxu0 %v1503
    %2058 = vmatpush1.bf16.msra.mxu0 %v1502
    %2059 = vmatprep.subr.bf16.mxu0 %v1509
    %2060 = vmatpush1.bf16.msra.mxu0 %v1508
    %2061 = vmatprep.subr.bf16.mxu0 %v1515
    %2062 = vmatpush1.bf16.msra.mxu0 %v1514
    %2063 = vmatprep.subr.bf16.mxu0 %v1521
    %2064 = vmatpush1.bf16.msra.mxu0 %v1520
    %2065 = vmatprep.subr.bf16.mxu0 %v1527
    %2066 = vmatpush1.bf16.msra.mxu0 %v1526
    %2067 = vmatprep.subr.bf16.mxu0 %v1533
    %2068 = vmatpush1.bf16.msra.mxu0 %v1532
    %2069 = vmatprep.subr.bf16.mxu0 %v1539
    %2070 = vmatpush1.bf16.msra.mxu0 %v1538
    %2071 = vmatprep.subr.bf16.mxu0 %v1545
    %2072 = vmatpush1.bf16.msra.mxu0 %v1544
    %2073 = vmatprep.mubr.bf16.mxu0 %v389
    %2074 = vmatmul.mubr.bf16.gmra.mrb[0].mxu0 %v388
    %v2075 = vpop.f32.mrb[0].mxu0
    %v2076 = vadd.f32 %v2035, %v2075
    %v2077 = vpop.f32.mrb[0].mxu0
    %v2078 = vadd.f32 %v2037, %v2077
    %v2079 = vpop.f32.mrb[0].mxu0
    %v2080 = vpop.f32.mrb[0].mxu0
    %2081 = vdwg.mxu0
    %2082 = vmatprep.subr.bf16.mxu0 %v1265
    %2083 = vmatpush1.bf16.msra.mxu0 %v1264
    %2084 = vmatprep.subr.bf16.mxu0 %v1271
    %2085 = vmatpush1.bf16.msra.mxu0 %v1270
    %2086 = vmatprep.subr.bf16.mxu0 %v1277
    %2087 = vmatpush1.bf16.msra.mxu0 %v1276
    %2088 = vmatprep.subr.bf16.mxu0 %v1283
    %2089 = vmatpush1.bf16.msra.mxu0 %v1282
    %2090 = vmatprep.subr.bf16.mxu0 %v1289
    %2091 = vmatpush1.bf16.msra.mxu0 %v1288
    %2092 = vmatprep.subr.bf16.mxu0 %v1295
    %2093 = vmatpush1.bf16.msra.mxu0 %v1294
    %2094 = vmatprep.subr.bf16.mxu0 %v1301
    %2095 = vmatpush1.bf16.msra.mxu0 %v1300
    %2096 = vmatprep.subr.bf16.mxu0 %v1307
    %2097 = vmatpush1.bf16.msra.mxu0 %v1306
    %2098 = vmatprep.subr.bf16.mxu0 %v1313
    %2099 = vmatpush1.bf16.msra.mxu0 %v1312
    %2100 = vmatprep.subr.bf16.mxu0 %v1319
    %2101 = vmatpush1.bf16.msra.mxu0 %v1318
    %2102 = vmatprep.subr.bf16.mxu0 %v1325
    %2103 = vmatpush1.bf16.msra.mxu0 %v1324
    %2104 = vmatprep.subr.bf16.mxu0 %v1331
    %2105 = vmatpush1.bf16.msra.mxu0 %v1330
    %2106 = vmatprep.subr.bf16.mxu0 %v1337
    %2107 = vmatpush1.bf16.msra.mxu0 %v1336
    %2108 = vmatprep.subr.bf16.mxu0 %v1343
    %2109 = vmatpush1.bf16.msra.mxu0 %v1342
    %2110 = vmatprep.subr.bf16.mxu0 %v1349
    %2111 = vmatpush1.bf16.msra.mxu0 %v1348
    %2112 = vmatprep.subr.bf16.mxu0 %v1355
    %2113 = vmatpush1.bf16.msra.mxu0 %v1354
    %2114 = vmatprep.mubr.bf16.mxu0 %v385
    %2115 = vmatmul.mubr.bf16.gmra.mrb[0].mxu0 %v384
    %v2116 = vpop.f32.mrb[0].mxu0
    %v2117 = vadd.f32 %v364, %v2116
    %v2118 = vpop.f32.mrb[0].mxu0
    %v2119 = vadd.f32 %v368, %v2118
    %v2120 = vpop.f32.mrb[0].mxu0
    %v2121 = vpop.f32.mrb[0].mxu0
    %2122 = vdwg.mxu0
    %2123 = vmatprep.subr.bf16.mxu0 %v1361
    %2124 = vmatpush1.bf16.msra.mxu0 %v1360
    %2125 = vmatprep.subr.bf16.mxu0 %v1367
    %2126 = vmatpush1.bf16.msra.mxu0 %v1366
    %2127 = vmatprep.subr.bf16.mxu0 %v1373
    %2128 = vmatpush1.bf16.msra.mxu0 %v1372
    %2129 = vmatprep.subr.bf16.mxu0 %v1379
    %2130 = vmatpush1.bf16.msra.mxu0 %v1378
    %2131 = vmatprep.subr.bf16.mxu0 %v1385
    %2132 = vmatpush1.bf16.msra.mxu0 %v1384
    %2133 = vmatprep.subr.bf16.mxu0 %v1391
    %2134 = vmatpush1.bf16.msra.mxu0 %v1390
    %2135 = vmatprep.subr.bf16.mxu0 %v1397
    %2136 = vmatpush1.bf16.msra.mxu0 %v1396
    %2137 = vmatprep.subr.bf16.mxu0 %v1403
    %2138 = vmatpush1.bf16.msra.mxu0 %v1402
    %2139 = vmatprep.subr.bf16.mxu0 %v1409
    %2140 = vmatpush1.bf16.msra.mxu0 %v1408
    %2141 = vmatprep.subr.bf16.mxu0 %v1415
    %2142 = vmatpush1.bf16.msra.mxu0 %v1414
    %2143 = vmatprep.subr.bf16.mxu0 %v1421
    %2144 = vmatpush1.bf16.msra.mxu0 %v1420
    %2145 = vmatprep.subr.bf16.mxu0 %v1427
    %2146 = vmatpush1.bf16.msra.mxu0 %v1426
    %2147 = vmatprep.subr.bf16.mxu0 %v1433
    %2148 = vmatpush1.bf16.msra.mxu0 %v1432
    %2149 = vmatprep.subr.bf16.mxu0 %v1439
    %2150 = vmatpush1.bf16.msra.mxu0 %v1438
    %2151 = vmatprep.subr.bf16.mxu0 %v1445
    %2152 = vmatpush1.bf16.msra.mxu0 %v1444
    %2153 = vmatprep.subr.bf16.mxu0 %v1451
    %2154 = vmatpush1.bf16.msra.mxu0 %v1450
    %2155 = vmatprep.mubr.bf16.mxu0 %v387
    %2156 = vmatmul.mubr.bf16.gmra.mrb[0].mxu0 %v386
    %v2157 = vpop.f32.mrb[0].mxu0
    %v2158 = vadd.f32 %v2117, %v2157
    %v2159 = vpop.f32.mrb[0].mxu0
    %v2160 = vadd.f32 %v2119, %v2159
    %v2161 = vpop.f32.mrb[0].mxu0
    %v2162 = vpop.f32.mrb[0].mxu0
    %2163 = vdwg.mxu0
    %2164 = vmatprep.subr.bf16.mxu0 %v1457
    %2165 = vmatpush1.bf16.msra.mxu0 %v1456
    %2166 = vmatprep.subr.bf16.mxu0 %v1463
    %2167 = vmatpush1.bf16.msra.mxu0 %v1462
    %2168 = vmatprep.subr.bf16.mxu0 %v1469
    %2169 = vmatpush1.bf16.msra.mxu0 %v1468
    %2170 = vmatprep.subr.bf16.mxu0 %v1475
    %2171 = vmatpush1.bf16.msra.mxu0 %v1474
    %2172 = vmatprep.subr.bf16.mxu0 %v1481
    %2173 = vmatpush1.bf16.msra.mxu0 %v1480
    %2174 = vmatprep.subr.bf16.mxu0 %v1487
    %2175 = vmatpush1.bf16.msra.mxu0 %v1486
    %2176 = vmatprep.subr.bf16.mxu0 %v1493
    %2177 = vmatpush1.bf16.msra.mxu0 %v1492
    %2178 = vmatprep.subr.bf16.mxu0 %v1499
    %2179 = vmatpush1.bf16.msra.mxu0 %v1498
    %2180 = vmatprep.subr.bf16.mxu0 %v1505
    %2181 = vmatpush1.bf16.msra.mxu0 %v1504
    %2182 = vmatprep.subr.bf16.mxu0 %v1511
    %2183 = vmatpush1.bf16.msra.mxu0 %v1510
    %2184 = vmatprep.subr.bf16.mxu0 %v1517
    %2185 = vmatpush1.bf16.msra.mxu0 %v1516
    %2186 = vmatprep.subr.bf16.mxu0 %v1523
    %2187 = vmatpush1.bf16.msra.mxu0 %v1522
    %2188 = vmatprep.subr.bf16.mxu0 %v1529
    %2189 = vmatpush1.bf16.msra.mxu0 %v1528
    %2190 = vmatprep.subr.bf16.mxu0 %v1535
    %2191 = vmatpush1.bf16.msra.mxu0 %v1534
    %2192 = vmatprep.subr.bf16.mxu0 %v1541
    %2193 = vmatpush1.bf16.msra.mxu0 %v1540
    %2194 = vmatprep.subr.bf16.mxu0 %v1547
    %2195 = vmatpush1.bf16.msra.mxu0 %v1546
    %2196 = vmatprep.mubr.bf16.mxu0 %v389
    %2197 = vmatmul.mubr.bf16.gmra.mrb[0].mxu0 %v388
    %v2198 = vpop.f32.mrb[0].mxu0
    %v2199 = vadd.f32 %v2158, %v2198
    %v2200 = vpop.f32.mrb[0].mxu0
    %v2201 = vadd.f32 %v2160, %v2200
    %v2202 = vpop.f32.mrb[0].mxu0
    %v2203 = vpop.f32.mrb[0].mxu0
    %2204 = vdwg.mxu0
    %v2205 = vtanh.pop %v1953
    %v2206 = vtanh.pop %v1955
    %v2207 = vtanh.pop %v2076
    %v2208 = vtanh.pop %v2078
    %v2209 = vtanh.pop %v2199
    %v2210 = vtanh.pop %v2201
    %v2211 = vpack.c.bf16 %v2205, %v2205
    %v2212 = vpack.c.bf16 %v2206, %v2206
    %v2213 = vpack.c.bf16 %v2207, %v2207
    %v2214 = vpack.c.bf16 %v2208, %v2208
    %v2215 = vpack.c.bf16 %v2209, %v2209
    %v2216 = vpack.c.bf16 %v2210, %v2210
    %v2223 = vunpack.c.l.b16 %v2211
    %v2224 = vunpack.c.l.b16 %v2212
    %v2225 = vunpack.c.l.b16 %v2213
    %v2226 = vunpack.c.l.b16 %v2214
    %v2227 = vunpack.c.l.b16 %v2215
    %v2228 = vunpack.c.l.b16 %v2216
    %v2229 = vpack.c.b16 %v2224, %v2223
    %v2230 = vpack.c.b16 %v2226, %v2225
    %v2231 = vpack.c.b16 %v2228, %v2227
    %2235 = vst [vmem:[#allocation8] sm:$0xff] %v2229
    %2236 = vst [vmem:[#allocation8 + $0x8] sm:$0xff] %v2230
    %2237 = vst [vmem:[#allocation8 + $0x10] sm:$0xff] %v2231
    // Predicated region
    $region26: #{tpu_custom_call.1} parent=1 // pred_check
      _
    $region27: #{tpu_custom_call.1} parent=1 // pred_check_branch
      %2239 = sbr.rel (0) target = $region29
    $region28: #{tpu_custom_call.1} parent=1 // pred_region
      %s2241 = ssub.s32 384, 384
      %2242 = vsyncadd [#allocation4], %s2241
      %s2244 = sshll.u32 [#allocation8], 4
      %s2245 = int_to_ptr.vmem [resolvable:$true] %s2244
      %2247 = dma.vmem_to_hbm [thread:$0]  %s2245, 384, %s3, [#allocation4]
    $region29: #{tpu_custom_call.1} parent=1 // pred_fallthru
      _
    // Predicated region
    $region30: #{tpu_custom_call.1} parent=1 // pred_check
      _
    $region31: #{tpu_custom_call.1} parent=1 // pred_check_branch
      %2249 = sbr.rel (0) target = $region33
    $region32: #{tpu_custom_call.1} parent=1 // pred_region
      %2250 = dma.done [#allocation4], 384
    $region33: #{tpu_custom_call.1} parent=1 // pred_fallthru
      _
    %2251 = vsyncpa [#allocation3], 1
    %2252 = vsyncpa [#allocation6], 1
    %2253 = vsyncpa [#allocation4], 1

</llo_original>
